<compile_context>
chip_gen: v7x
topology: tpu7x:2x2x1
jax: 0.10.0
libtpu: 0.0.40
codegen_flags: <defaults>
</compile_context>

<pallas_src>
import jax
import jax.numpy as jnp
from jax.experimental import pallas as pl
from jax.experimental.pallas import tpu as pltpu


def _leaky_relu(h, slope=0.01):
    # torch.nn.LeakyReLU default negative_slope = 0.01
    return jnp.where(h > 0, h, slope * h)


def realnvp_kernel(x_ref, mask_ref, scale_ref,
                   w1_ref, b1_ref, w2_ref, b2_ref, w3_ref, b3_ref,
                   y_ref, ld_ref):
    """One batch tile in (batch, feature) layout.

    x_ref:  (TB, D) f32          mask/scale: (1, D) f32
    w1: (D, 2H)   b1: (1, 2H)    (mask folded in; s-net cols | t-net cols)
    w2: (2H, 2H)  b2: (1, 2H)    (block diagonal)
    w3: (2H, 2D)  b3: (1, 2D)    (block diagonal)
    y_ref: (TB, D) f32           ld_ref: (TB, 1) f32
    """
    x = x_ref[...]                       # (TB, D)
    mask = mask_ref[...]                 # (1, D) -> broadcasts over rows
    scale = scale_ref[...]               # (1, D)
    d = mask.shape[1]

    mm = w1_ref.dtype                    # f32 by default (bf16 if use_bf16)

    # Stacked 3-layer MLP (s-net and t-net fused): mask is already folded
    # into w1, so raw x goes straight to the MXU.
    h = jnp.dot(x.astype(mm), w1_ref[...],
                preferred_element_type=jnp.float32) + b1_ref[...]
    h = _leaky_relu(h)
    h = jnp.dot(h.astype(mm), w2_ref[...],
                preferred_element_type=jnp.float32) + b2_ref[...]
    h = _leaky_relu(h)
    h = jnp.dot(h.astype(mm), w3_ref[...],
                preferred_element_type=jnp.float32) + b3_ref[...]   # (TB, 2D)

    s = jnp.clip(h[:, :d] * scale, -5.0, 5.0)   # (TB, D)
    t = h[:, d:]                                # (TB, D)

    one_minus_mask = 1.0 - mask
    x_mask = x * mask                           # VPU, off the MXU critical path
    y_ref[...] = x_mask + one_minus_mask * (x * jnp.exp(s) + t)
    ld_ref[...] = jnp.sum(one_minus_mask * s, axis=1, keepdims=True)


def pack_params(mask, scale, s_params, t_params, use_bf16=False):
    """One-time packing of the two MLPs into a single stacked MLP.

    s_params / t_params: (W1, b1, W2, b2, W3, b3) in PyTorch (out, in) layout.
    Weights are transposed once here to (in, out) so the kernel computes
    x @ W with standard MXU orientation.  The binary mask is folded into the
    first layer.  Done once, outside the per-call path.
    """
    d = mask.shape[0]
    sw1, sb1, sw2, sb2, sw3, sb3 = s_params
    tw1, tb1, tw2, tb2, tw3, tb3 = t_params
    hdim = sw1.shape[0]
    wdt = jnp.bfloat16 if use_bf16 else jnp.float32

    mask_row = mask.reshape(1, d).astype(jnp.float32)

    zhh = jnp.zeros((hdim, hdim), jnp.float32)
    zdh = jnp.zeros((d, hdim), jnp.float32)

    # Layer 1: stack s/t nets and fold the mask along the input axis.
    w1 = jnp.concatenate([sw1, tw1], axis=0) * mask_row            # (2H, D)
    b1 = jnp.concatenate([sb1, tb1], axis=0).reshape(1, 2 * hdim)
    w2 = jnp.block([[sw2, zhh], [zhh, tw2]])                       # (2H, 2H)
    b2 = jnp.concatenate([sb2, tb2], axis=0).reshape(1, 2 * hdim)
    w3 = jnp.block([[sw3, zdh], [zdh, tw3]])                       # (2D, 2H)
    b3 = jnp.concatenate([sb3, tb3], axis=0).reshape(1, 2 * d)

    return dict(
        mask=mask_row,
        scale=scale.reshape(1, d).astype(jnp.float32),
        w1=w1.T.astype(wdt), b1=b1.astype(jnp.float32),            # (D, 2H)
        w2=w2.T.astype(wdt), b2=b2.astype(jnp.float32),            # (2H, 2H)
        w3=w3.T.astype(wdt), b3=b3.astype(jnp.float32),            # (2H, 2D)
    )


def _plan_tiles(batch, cap=2048, min_tiles=2):
    """Pad batch to a multiple of 256 and pick the largest 256-multiple tile
    (<= cap) that divides the padded batch while keeping >= min_tiles grid
    steps when possible (so v7x's two TensorCores both get work)."""
    padded = -(-batch // 256) * 256
    candidates = [t for t in range(256, min(cap, padded) + 1, 256)
                  if padded % t == 0]
    multi = [t for t in candidates if padded // t >= min_tiles]
    tile = max(multi) if multi else max(candidates)
    return padded, tile


@jax.jit
def realnvp_forward(x, packed):
    """x: (B, D) f32. Returns (y (B, D), log_det (B,))."""
    batch, d = x.shape
    padded, tile_b = _plan_tiles(batch)

    # Pad-and-ignore tail (only materializes when batch % 256 != 0); padded
    # rows compute harmless garbage that is sliced off below.
    if padded != batch:
        x_in = jnp.pad(x, ((0, padded - batch), (0, 0)))
    else:
        x_in = x

    grid = (padded // tile_b,)

    weights = (packed["mask"], packed["scale"],
               packed["w1"], packed["b1"],
               packed["w2"], packed["b2"],
               packed["w3"], packed["b3"])

    # Weights / mask / scale: full-array blocks with constant index maps ->
    # DMA'd once per core, resident in VMEM across all batch tiles.
    weight_specs = [pl.BlockSpec(w.shape, lambda i: (0, 0)) for w in weights]

    y_pad, ld_pad = pl.pallas_call(
        realnvp_kernel,
        grid=grid,
        in_specs=[pl.BlockSpec((tile_b, d), lambda i: (i, 0))] + weight_specs,
        out_specs=(pl.BlockSpec((tile_b, d), lambda i: (i, 0)),
                   pl.BlockSpec((tile_b, 1), lambda i: (i, 0))),
        out_shape=(jax.ShapeDtypeStruct((padded, d), jnp.float32),
                   jax.ShapeDtypeStruct((padded, 1), jnp.float32)),
        compiler_params=pltpu.CompilerParams(
            dimension_semantics=("parallel",)),   # batch tiles shard across TCs
    )(x_in, *weights)

    return y_pad[:batch], ld_pad[:batch, 0]


def _reference_forward(x, mask, scale, s_params, t_params):
    """Pure-JAX f32 reference mirroring the PyTorch module."""
    def linear(h, w, b):
        return jnp.dot(h, w.T, precision=jax.lax.Precision.HIGHEST) + b

    def mlp(h, params):
        w1, b1, w2, b2, w3, b3 = params
        h = _leaky_relu(linear(h, w1, b1))
        h = _leaky_relu(linear(h, w2, b2))
        return linear(h, w3, b3)

    m = mask.reshape(1, -1)
    x_mask = x * m
    s = jnp.clip(mlp(x_mask, s_params) * scale, -5.0, 5.0)
    t = mlp(x_mask, t_params)
    y = x_mask + (1 - m) * (x * jnp.exp(s) + t)
    log_det = ((1 - m) * s).sum(-1)
    return y, log_det


if __name__ == "__main__":
    dim, hidden = 8, 32

    key = jax.random.PRNGKey(0)
    keys = jax.random.split(key, 16)

    def linear_params(kw, kb, in_f, out_f):
        # deterministic small-scale init (PyTorch weight layout (out, in))
        bound = 1.0 / jnp.sqrt(in_f)
        w = jax.random.uniform(kw, (out_f, in_f), jnp.float32, -bound, bound)
        b = jax.random.uniform(kb, (out_f,), jnp.float32, -bound, bound)
        return w, b

    sw1, sb1 = linear_params(keys[0], keys[1], dim, hidden)
    sw2, sb2 = linear_params(keys[2], keys[3], hidden, hidden)
    sw3, sb3 = linear_params(keys[4], keys[5], hidden, dim)
    tw1, tb1 = linear_params(keys[6], keys[7], dim, hidden)
    tw2, tb2 = linear_params(keys[8], keys[9], hidden, hidden)
    tw3, tb3 = linear_params(keys[10], keys[11], hidden, dim)
    s_params = (sw1, sb1, sw2, sb2, sw3, sb3)
    t_params = (tw1, tb1, tw2, tb2, tw3, tb3)

    # module init sets scale to zeros; use small random values so exp(s) is exercised
    scale = 0.1 * jax.random.normal(keys[12], (dim,), jnp.float32)
    # alternating binary mask (standard RealNVP checkerboard on flat dims)
    mask = (jnp.arange(dim) % 2).astype(jnp.float32)

    packed = pack_params(mask, scale, s_params, t_params, use_bf16=False)

    # batch=8: pads to 256, single tile. batch=1024: tile_b=512, grid=(2,),
    # exercises the multi-tile / megacore-parallel path with no padding.
    for batch, kx in ((8, keys[13]), (1024, keys[14])):
        x = jax.random.normal(kx, (batch, dim), jnp.float32)
        y, log_det = realnvp_forward(x, packed)
        jax.block_until_ready((y, log_det))

        assert y.shape == (batch, dim) and log_det.shape == (batch,)

        # f32 weights in the kernel -> results match the exact-f32 reference
        # to within MXU f32-matmul precision.
        y_ref, ld_ref = _reference_forward(x, mask, scale, s_params, t_params)
        assert jnp.allclose(y, y_ref, atol=1e-2, rtol=1e-2), "y mismatch"
        assert jnp.allclose(log_det, ld_ref, atol=1e-2, rtol=1e-2), \
            "log_det mismatch"

    print("KERNEL_OK")
</pallas_src>

<mosaic_0001>
module attributes {stable_mosaic.version = 11 : i64} {
  func.func @realnvp_kernel(%arg0: i32, %arg1: memref<256x8xf32, #tpu.memory_space<vmem>>, %arg2: memref<1x8xf32, #tpu.memory_space<vmem>>, %arg3: memref<1x8xf32, #tpu.memory_space<vmem>>, %arg4: memref<8x64xf32, #tpu.memory_space<vmem>>, %arg5: memref<1x64xf32, #tpu.memory_space<vmem>>, %arg6: memref<64x64xf32, #tpu.memory_space<vmem>>, %arg7: memref<1x64xf32, #tpu.memory_space<vmem>>, %arg8: memref<64x16xf32, #tpu.memory_space<vmem>>, %arg9: memref<1x16xf32, #tpu.memory_space<vmem>>, %arg10: memref<256x8xf32, #tpu.memory_space<vmem>>, %arg11: memref<256x1xf32, #tpu.memory_space<vmem>>) attributes {dimension_semantics = [#tpu.dimension_semantics<parallel>], iteration_bounds = array<i64: 1>, scalar_prefetch = 0 : i64, scratch_operands = 0 : i64, tpu.core_type = #tpu.core_type<tc>, window_params = [{transform_indices = @transform_0, window_bounds = array<i64: 256, 8>}, {pipeline_mode = #tpu.pipeline_mode<synchronous>, transform_indices = @transform_1, window_bounds = array<i64: 1, 8>}, {pipeline_mode = #tpu.pipeline_mode<synchronous>, transform_indices = @transform_2, window_bounds = array<i64: 1, 8>}, {pipeline_mode = #tpu.pipeline_mode<synchronous>, transform_indices = @transform_3, window_bounds = array<i64: 8, 64>}, {pipeline_mode = #tpu.pipeline_mode<synchronous>, transform_indices = @transform_4, window_bounds = array<i64: 1, 64>}, {pipeline_mode = #tpu.pipeline_mode<synchronous>, transform_indices = @transform_5, window_bounds = array<i64: 64, 64>}, {pipeline_mode = #tpu.pipeline_mode<synchronous>, transform_indices = @transform_6, window_bounds = array<i64: 1, 64>}, {pipeline_mode = #tpu.pipeline_mode<synchronous>, transform_indices = @transform_7, window_bounds = array<i64: 64, 16>}, {pipeline_mode = #tpu.pipeline_mode<synchronous>, transform_indices = @transform_8, window_bounds = array<i64: 1, 16>}, {transform_indices = @transform_9, window_bounds = array<i64: 256, 8>}, {transform_indices = @transform_10, window_bounds = array<i64: 256, 1>}]} {
    %c0 = arith.constant 0 : index
    %c0_0 = arith.constant 0 : index
    %0 = vector.load %arg1[%c0, %c0_0] : memref<256x8xf32, #tpu.memory_space<vmem>>, vector<256x8xf32>
    %c0_1 = arith.constant 0 : index
    %c0_2 = arith.constant 0 : index
    %1 = vector.load %arg2[%c0_1, %c0_2] : memref<1x8xf32, #tpu.memory_space<vmem>>, vector<1x8xf32>
    %c0_3 = arith.constant 0 : index
    %c0_4 = arith.constant 0 : index
    %2 = vector.load %arg3[%c0_3, %c0_4] : memref<1x8xf32, #tpu.memory_space<vmem>>, vector<1x8xf32>
    %c0_5 = arith.constant 0 : index
    %c0_6 = arith.constant 0 : index
    %3 = vector.load %arg4[%c0_5, %c0_6] : memref<8x64xf32, #tpu.memory_space<vmem>>, vector<8x64xf32>
    %cst = arith.constant dense<0.000000e+00> : vector<256x64xf32>
    %4 = tpu.matmul %0, %3, %cst {dimension_numbers = #tpu.dot_dimension_numbers<[1], [0], [0], [1], [0, 0, 1, 1], [], []>} : vector<256x8xf32>, vector<8x64xf32>, vector<256x64xf32> -> vector<256x64xf32>
    %c0_7 = arith.constant 0 : index
    %c0_8 = arith.constant 0 : index
    %5 = vector.load %arg5[%c0_7, %c0_8] : memref<1x64xf32, #tpu.memory_space<vmem>>, vector<1x64xf32>
    %6 = vector.broadcast %5 : vector<1x64xf32> to vector<256x64xf32>
    %7 = arith.addf %4, %6 : vector<256x64xf32>
    %cst_9 = arith.constant 0.000000e+00 : f32
    %8 = vector.broadcast %cst_9 : f32 to vector<256x64xf32>
    %9 = arith.cmpf ogt, %7, %8 : vector<256x64xf32>
    %cst_10 = arith.constant 0.00999999977 : f32
    %10 = vector.broadcast %cst_10 : f32 to vector<256x64xf32>
    %11 = arith.mulf %10, %7 : vector<256x64xf32>
    %12 = arith.select %9, %7, %11 : vector<256x64xi1>, vector<256x64xf32>
    %c0_11 = arith.constant 0 : index
    %c0_12 = arith.constant 0 : index
    %13 = vector.load %arg6[%c0_11, %c0_12] : memref<64x64xf32, #tpu.memory_space<vmem>>, vector<64x64xf32>
    %cst_13 = arith.constant dense<0.000000e+00> : vector<256x64xf32>
    %14 = tpu.matmul %12, %13, %cst_13 {dimension_numbers = #tpu.dot_dimension_numbers<[1], [0], [0], [1], [0, 0, 1, 1], [], []>} : vector<256x64xf32>, vector<64x64xf32>, vector<256x64xf32> -> vector<256x64xf32>
    %c0_14 = arith.constant 0 : index
    %c0_15 = arith.constant 0 : index
    %15 = vector.load %arg7[%c0_14, %c0_15] : memref<1x64xf32, #tpu.memory_space<vmem>>, vector<1x64xf32>
    %16 = vector.broadcast %15 : vector<1x64xf32> to vector<256x64xf32>
    %17 = arith.addf %14, %16 : vector<256x64xf32>
    %cst_16 = arith.constant 0.000000e+00 : f32
    %18 = vector.broadcast %cst_16 : f32 to vector<256x64xf32>
    %19 = arith.cmpf ogt, %17, %18 : vector<256x64xf32>
    %cst_17 = arith.constant 0.00999999977 : f32
    %20 = vector.broadcast %cst_17 : f32 to vector<256x64xf32>
    %21 = arith.mulf %20, %17 : vector<256x64xf32>
    %22 = arith.select %19, %17, %21 : vector<256x64xi1>, vector<256x64xf32>
    %c0_18 = arith.constant 0 : index
    %c0_19 = arith.constant 0 : index
    %23 = vector.load %arg8[%c0_18, %c0_19] : memref<64x16xf32, #tpu.memory_space<vmem>>, vector<64x16xf32>
    %cst_20 = arith.constant dense<0.000000e+00> : vector<256x16xf32>
    %24 = tpu.matmul %22, %23, %cst_20 {dimension_numbers = #tpu.dot_dimension_numbers<[1], [0], [0], [1], [0, 0, 1, 1], [], []>} : vector<256x64xf32>, vector<64x16xf32>, vector<256x16xf32> -> vector<256x16xf32>
    %c0_21 = arith.constant 0 : index
    %c0_22 = arith.constant 0 : index
    %25 = vector.load %arg9[%c0_21, %c0_22] : memref<1x16xf32, #tpu.memory_space<vmem>>, vector<1x16xf32>
    %26 = vector.broadcast %25 : vector<1x16xf32> to vector<256x16xf32>
    %27 = arith.addf %24, %26 : vector<256x16xf32>
    %28 = vector.extract_strided_slice %27 {offsets = [0, 0], sizes = [256, 8], strides = [1, 1]} : vector<256x16xf32> to vector<256x8xf32>
    %29 = vector.broadcast %2 : vector<1x8xf32> to vector<256x8xf32>
    %30 = arith.mulf %28, %29 : vector<256x8xf32>
    %cst_23 = arith.constant -5.000000e+00 : f32
    %cst_24 = arith.constant 5.000000e+00 : f32
    %31 = vector.broadcast %cst_23 : f32 to vector<256x8xf32>
    %32 = arith.maximumf %31, %30 : vector<256x8xf32>
    %33 = vector.broadcast %cst_24 : f32 to vector<256x8xf32>
    %34 = arith.minimumf %33, %32 : vector<256x8xf32>
    %35 = vector.extract_strided_slice %27 {offsets = [0, 8], sizes = [256, 8], strides = [1, 1]} : vector<256x16xf32> to vector<256x8xf32>
    %cst_25 = arith.constant 1.000000e+00 : f32
    %36 = vector.broadcast %cst_25 : f32 to vector<1x8xf32>
    %37 = arith.subf %36, %1 : vector<1x8xf32>
    %38 = vector.broadcast %1 : vector<1x8xf32> to vector<256x8xf32>
    %39 = arith.mulf %0, %38 : vector<256x8xf32>
    %40 = math.exp %34 : vector<256x8xf32>
    %41 = arith.mulf %0, %40 : vector<256x8xf32>
    %42 = arith.addf %41, %35 : vector<256x8xf32>
    %43 = vector.broadcast %37 : vector<1x8xf32> to vector<256x8xf32>
    %44 = arith.mulf %43, %42 : vector<256x8xf32>
    %45 = arith.addf %39, %44 : vector<256x8xf32>
    %c0_26 = arith.constant 0 : index
    %c0_27 = arith.constant 0 : index
    %46 = vector.load %arg10[%c0_26, %c0_27] : memref<256x8xf32, #tpu.memory_space<vmem>>, vector<256x8xf32>
    tpu.vector_store %arg10[%c0_26, %c0_27], %45 {strides = array<i32>} : memref<256x8xf32, #tpu.memory_space<vmem>>, vector<256x8xf32>,
    %47 = vector.broadcast %37 : vector<1x8xf32> to vector<256x8xf32>
    %48 = arith.mulf %47, %34 : vector<256x8xf32>
    %cst_28 = arith.constant dense<0.000000e+00> : vector<256xf32>
    %49 = vector.multi_reduction <add>, %48, %cst_28 [1] : vector<256x8xf32> to vector<256xf32>
    %50 = vector.shape_cast %49 : vector<256xf32> to vector<256x1xf32>
    %c0_29 = arith.constant 0 : index
    %c0_30 = arith.constant 0 : index
    %51 = vector.load %arg11[%c0_29, %c0_30] : memref<256x1xf32, #tpu.memory_space<vmem>>, vector<256x1xf32>
    tpu.vector_store %arg11[%c0_29, %c0_30], %50 {strides = array<i32>} : memref<256x1xf32, #tpu.memory_space<vmem>>, vector<256x1xf32>,
    return
  }
  func.func @transform_0(%arg0: i32) -> (i32, i32) {
    %c0_i32 = arith.constant 0 : i32
    %c0_i32_0 = arith.constant 0 : i32
    return %arg0, %c0_i32 : i32, i32
  }
  func.func @transform_1(%arg0: i32) -> (i32, i32) {
    %c0_i32 = arith.constant 0 : i32
    %c0_i32_0 = arith.constant 0 : i32
    %c0_i32_1 = arith.constant 0 : i32
    return %c0_i32, %c0_i32_0 : i32, i32
  }
  func.func @transform_2(%arg0: i32) -> (i32, i32) {
    %c0_i32 = arith.constant 0 : i32
    %c0_i32_0 = arith.constant 0 : i32
    %c0_i32_1 = arith.constant 0 : i32
    return %c0_i32, %c0_i32_0 : i32, i32
  }
  func.func @transform_3(%arg0: i32) -> (i32, i32) {
    %c0_i32 = arith.constant 0 : i32
    %c0_i32_0 = arith.constant 0 : i32
    %c0_i32_1 = arith.constant 0 : i32
    return %c0_i32, %c0_i32_0 : i32, i32
  }
  func.func @transform_4(%arg0: i32) -> (i32, i32) {
    %c0_i32 = arith.constant 0 : i32
    %c0_i32_0 = arith.constant 0 : i32
    %c0_i32_1 = arith.constant 0 : i32
    return %c0_i32, %c0_i32_0 : i32, i32
  }
  func.func @transform_5(%arg0: i32) -> (i32, i32) {
    %c0_i32 = arith.constant 0 : i32
    %c0_i32_0 = arith.constant 0 : i32
    %c0_i32_1 = arith.constant 0 : i32
    return %c0_i32, %c0_i32_0 : i32, i32
  }
  func.func @transform_6(%arg0: i32) -> (i32, i32) {
    %c0_i32 = arith.constant 0 : i32
    %c0_i32_0 = arith.constant 0 : i32
    %c0_i32_1 = arith.constant 0 : i32
    return %c0_i32, %c0_i32_0 : i32, i32
  }
  func.func @transform_7(%arg0: i32) -> (i32, i32) {
    %c0_i32 = arith.constant 0 : i32
    %c0_i32_0 = arith.constant 0 : i32
    %c0_i32_1 = arith.constant 0 : i32
    return %c0_i32, %c0_i32_0 : i32, i32
  }
  func.func @transform_8(%arg0: i32) -> (i32, i32) {
    %c0_i32 = arith.constant 0 : i32
    %c0_i32_0 = arith.constant 0 : i32
    %c0_i32_1 = arith.constant 0 : i32
    return %c0_i32, %c0_i32_0 : i32, i32
  }
  func.func @transform_9(%arg0: i32) -> (i32, i32) {
    %c0_i32 = arith.constant 0 : i32
    %c0_i32_0 = arith.constant 0 : i32
    return %arg0, %c0_i32 : i32, i32
  }
  func.func @transform_10(%arg0: i32) -> (i32, i32) {
    %c0_i32 = arith.constant 0 : i32
    %c0_i32_0 = arith.constant 0 : i32
    return %arg0, %c0_i32 : i32, i32
  }
}

</mosaic_0001>

<llo_original>
// kernel: realnvp_forward.1
$region0: #{realnvp_forward.1}
  #allocation0 [shape = 'u32[]', space=smem, size = 0x4, offset = 0x4, fixed_abs, tag = 'smem constant byte address 0x4 - core index']
  #allocation1 [shape = 'u32[144,128]{1,0:T(1,128)}', space=vmem, size = 0x12000, scoped, tag = 'internal scratch']
  %s0 = inlined_call_operand.vmem [shape: f32[256,8], index: 0, kind: input, shape index: {}]
  %s1 = inlined_call_operand.vmem [shape: f32[1,8], index: 1, kind: input, shape index: {}]
  %s2 = inlined_call_operand.vmem [shape: f32[1,8], index: 2, kind: input, shape index: {}]
  %s3 = inlined_call_operand.vmem [shape: f32[8,64], index: 3, kind: input, shape index: {}]
  %s4 = inlined_call_operand.vmem [shape: f32[1,64], index: 4, kind: input, shape index: {}]
  %s5 = inlined_call_operand.vmem [shape: f32[64,64], index: 5, kind: input, shape index: {}]
  %s6 = inlined_call_operand.vmem [shape: f32[1,64], index: 6, kind: input, shape index: {}]
  %s7 = inlined_call_operand.vmem [shape: f32[64,16], index: 7, kind: input, shape index: {}]
  %s8 = inlined_call_operand.vmem [shape: f32[1,16], index: 8, kind: input, shape index: {}]
  %s9 = inlined_call_operand.vmem [shape: f32[256,8], index: 9, kind: output, shape index: {0}]
  %s10 = inlined_call_operand.vmem [shape: f32[256,1], index: 10, kind: output, shape index: {1}]
  %11 = xla_tuple %s9, %s10
  %s12 = sld [smem:[#allocation0]]
  $region54: #{realnvp_forward.1} parent=0
    _
  %s14 = ssub.s32 1, %s12
  %s15 = scalar_select 0, %s14, %s12
  // Predicated region
  $region2: #{realnvp_forward.1} parent=0 // pred_check
    _
  $region3: #{realnvp_forward.1} parent=0 // pred_check_branch
    %17 = sbr.rel (0) target = $region5
  $region4: #{realnvp_forward.1} parent=0 // pred_region
    _
  $region5: #{realnvp_forward.1} parent=0 // pred_fallthru
    _
  // Predicated region
  $region6: #{realnvp_forward.1} parent=0 // pred_check
    _
  $region7: #{realnvp_forward.1} parent=0 // pred_check_branch
    %19 = sbr.rel (0) target = $region9
  $region8: #{realnvp_forward.1} parent=0 // pred_region
    _
  $region9: #{realnvp_forward.1} parent=0 // pred_fallthru
    _
  // Predicated region
  $region10: #{realnvp_forward.1} parent=0 // pred_check
    _
  $region11: #{realnvp_forward.1} parent=0 // pred_check_branch
    %21 = sbr.rel (0) target = $region13
  $region12: #{realnvp_forward.1} parent=0 // pred_region
    _
  $region13: #{realnvp_forward.1} parent=0 // pred_fallthru
    _
  // Predicated region
  $region14: #{realnvp_forward.1} parent=0 // pred_check
    _
  $region15: #{realnvp_forward.1} parent=0 // pred_check_branch
    %23 = sbr.rel (0) target = $region17
  $region16: #{realnvp_forward.1} parent=0 // pred_region
    _
  $region17: #{realnvp_forward.1} parent=0 // pred_fallthru
    _
  // Predicated region
  $region18: #{realnvp_forward.1} parent=0 // pred_check
    _
  $region19: #{realnvp_forward.1} parent=0 // pred_check_branch
    %25 = sbr.rel (0) target = $region21
  $region20: #{realnvp_forward.1} parent=0 // pred_region
    _
  $region21: #{realnvp_forward.1} parent=0 // pred_fallthru
    _
  // Predicated region
  $region22: #{realnvp_forward.1} parent=0 // pred_check
    _
  $region23: #{realnvp_forward.1} parent=0 // pred_check_branch
    %27 = sbr.rel (0) target = $region25
  $region24: #{realnvp_forward.1} parent=0 // pred_region
    _
  $region25: #{realnvp_forward.1} parent=0 // pred_fallthru
    _
  // Predicated region
  $region26: #{realnvp_forward.1} parent=0 // pred_check
    _
  $region27: #{realnvp_forward.1} parent=0 // pred_check_branch
    %29 = sbr.rel (0) target = $region29
  $region28: #{realnvp_forward.1} parent=0 // pred_region
    _
  $region29: #{realnvp_forward.1} parent=0 // pred_fallthru
    _
  // Predicated region
  $region30: #{realnvp_forward.1} parent=0 // pred_check
    _
  $region31: #{realnvp_forward.1} parent=0 // pred_check_branch
    %31 = sbr.rel (0) target = $region33
  $region32: #{realnvp_forward.1} parent=0 // pred_region
    _
  $region33: #{realnvp_forward.1} parent=0 // pred_fallthru
    _
  // Predicated region
  $region34: #{realnvp_forward.1} parent=0 // pred_check
    _
  $region35: #{realnvp_forward.1} parent=0 // pred_check_branch
    %33 = sbr.rel (0) target = $region37
  $region36: #{realnvp_forward.1} parent=0 // pred_region
    _
  $region37: #{realnvp_forward.1} parent=0 // pred_fallthru
    _
  %v34 = vld [vmem:[%s0] sm:$0xff]
  %v35 = vld [vmem:[%s0 + $0x8] sm:$0xff]
  %v36 = vld [vmem:[%s0 + $0x10] sm:$0xff]
  %v37 = vld [vmem:[%s0 + $0x18] sm:$0xff]
  %v38 = vld [vmem:[%s0 + $0x20] sm:$0xff]
  %v39 = vld [vmem:[%s0 + $0x28] sm:$0xff]
  %v40 = vld [vmem:[%s0 + $0x30] sm:$0xff]
  %v41 = vld [vmem:[%s0 + $0x38] sm:$0xff]
  %v42 = vld [vmem:[%s0 + $0x40] sm:$0xff]
  %v43 = vld [vmem:[%s0 + $0x48] sm:$0xff]
  %v44 = vld [vmem:[%s0 + $0x50] sm:$0xff]
  %v45 = vld [vmem:[%s0 + $0x58] sm:$0xff]
  %v46 = vld [vmem:[%s0 + $0x60] sm:$0xff]
  %v47 = vld [vmem:[%s0 + $0x68] sm:$0xff]
  %v48 = vld [vmem:[%s0 + $0x70] sm:$0xff]
  %v49 = vld [vmem:[%s0 + $0x78] sm:$0xff]
  %v50 = vld [vmem:[%s0 + $0x80] sm:$0xff]
  %v51 = vld [vmem:[%s0 + $0x88] sm:$0xff]
  %v52 = vld [vmem:[%s0 + $0x90] sm:$0xff]
  %v53 = vld [vmem:[%s0 + $0x98] sm:$0xff]
  %v54 = vld [vmem:[%s0 + $0xa0] sm:$0xff]
  %v55 = vld [vmem:[%s0 + $0xa8] sm:$0xff]
  %v56 = vld [vmem:[%s0 + $0xb0] sm:$0xff]
  %v57 = vld [vmem:[%s0 + $0xb8] sm:$0xff]
  %v58 = vld [vmem:[%s0 + $0xc0] sm:$0xff]
  %v59 = vld [vmem:[%s0 + $0xc8] sm:$0xff]
  %v60 = vld [vmem:[%s0 + $0xd0] sm:$0xff]
  %v61 = vld [vmem:[%s0 + $0xd8] sm:$0xff]
  %v62 = vld [vmem:[%s0 + $0xe0] sm:$0xff]
  %v63 = vld [vmem:[%s0 + $0xe8] sm:$0xff]
  %v64 = vld [vmem:[%s0 + $0xf0] sm:$0xff]
  %v65 = vld [vmem:[%s0 + $0xf8] sm:$0xff]
  %v66 = vld [vmem:[%s1] sm:$0x1]
  %v67 = vld [vmem:[%s2] sm:$0x1]
  %v68 = vld [vmem:[%s3] sm:$0xff]
  %v69 = vld [vmem:[%s4] sm:$0x1]
  %v71 = vlaneseq
  %v72 = vshrl.u32 %v71, 7
  %v73 = vsub.s32 0, %v72
  %v74 = vrot.slane %v69, %v73
  %vm76 = vcmask 64512
  %v78 = vsel %vm76, %v34, 0
  %v81 = vsel %vm76, %v35, 0
  %v84 = vsel %vm76, %v36, 0
  %v87 = vsel %vm76, %v37, 0
  %v90 = vsel %vm76, %v38, 0
  %v93 = vsel %vm76, %v39, 0
  %v96 = vsel %vm76, %v40, 0
  %v99 = vsel %vm76, %v41, 0
  %v102 = vsel %vm76, %v42, 0
  %v105 = vsel %vm76, %v43, 0
  %v108 = vsel %vm76, %v44, 0
  %v111 = vsel %vm76, %v45, 0
  %v114 = vsel %vm76, %v46, 0
  %v117 = vsel %vm76, %v47, 0
  %v120 = vsel %vm76, %v48, 0
  %v123 = vsel %vm76, %v49, 0
  %v126 = vsel %vm76, %v50, 0
  %v129 = vsel %vm76, %v51, 0
  %v132 = vsel %vm76, %v52, 0
  %v135 = vsel %vm76, %v53, 0
  %v138 = vsel %vm76, %v54, 0
  %v141 = vsel %vm76, %v55, 0
  %v144 = vsel %vm76, %v56, 0
  %v147 = vsel %vm76, %v57, 0
  %v150 = vsel %vm76, %v58, 0
  %v153 = vsel %vm76, %v59, 0
  %v156 = vsel %vm76, %v60, 0
  %v159 = vsel %vm76, %v61, 0
  %v162 = vsel %vm76, %v62, 0
  %v165 = vsel %vm76, %v63, 0
  %v168 = vsel %vm76, %v64, 0
  %v171 = vsel %vm76, %v65, 0
  %173 = vmatprep.subr.mxu0 0.0
  %174 = vmatpush1.msra.mxu0 %v68
  %175 = vmatprep.subr.mxu0 0.0
  %176 = vmatpush1.msra.mxu0 0.0
  %177 = vmatprep.subr.mxu0 0.0
  %178 = vmatpush1.msra.mxu0 0.0
  %179 = vmatprep.subr.mxu0 0.0
  %180 = vmatpush1.msra.mxu0 0.0
  %181 = vmatprep.subr.mxu0 0.0
  %182 = vmatpush1.msra.mxu0 0.0
  %183 = vmatprep.subr.mxu0 0.0
  %184 = vmatpush1.msra.mxu0 0.0
  %185 = vmatprep.subr.mxu0 0.0
  %186 = vmatpush1.msra.mxu0 0.0
  %187 = vmatprep.subr.mxu0 0.0
  %188 = vmatpush1.msra.mxu0 0.0
  %189 = vmatprep.subr.mxu0 0.0
  %190 = vmatpush1.msra.mxu0 0.0
  %191 = vmatprep.subr.mxu0 0.0
  %192 = vmatpush1.msra.mxu0 0.0
  %193 = vmatprep.subr.mxu0 0.0
  %194 = vmatpush1.msra.mxu0 0.0
  %195 = vmatprep.subr.mxu0 0.0
  %196 = vmatpush1.msra.mxu0 0.0
  %197 = vmatprep.subr.mxu0 0.0
  %198 = vmatpush1.msra.mxu0 0.0
  %199 = vmatprep.subr.mxu0 0.0
  %200 = vmatpush1.msra.mxu0 0.0
  %201 = vmatprep.subr.mxu0 0.0
  %202 = vmatpush1.msra.mxu0 0.0
  %203 = vmatprep.subr.mxu0 0.0
  %204 = vmatpush1.msra.mxu0 0.0
  %205 = vmatprep.subr.mxu0 0.0
  %206 = vmatpush1.msra.mxu0 0.0
  %207 = vmatprep.subr.mxu0 0.0
  %208 = vmatpush1.msra.mxu0 0.0
  %209 = vmatprep.subr.mxu0 0.0
  %210 = vmatpush1.msra.mxu0 0.0
  %211 = vmatprep.subr.mxu0 0.0
  %212 = vmatpush1.msra.mxu0 0.0
  %213 = vmatprep.subr.mxu0 0.0
  %214 = vmatpush1.msra.mxu0 0.0
  %215 = vmatprep.subr.mxu0 0.0
  %216 = vmatpush1.msra.mxu0 0.0
  %217 = vmatprep.subr.mxu0 0.0
  %218 = vmatpush1.msra.mxu0 0.0
  %219 = vmatprep.subr.mxu0 0.0
  %220 = vmatpush1.msra.mxu0 0.0
  %221 = vmatprep.subr.mxu0 0.0
  %222 = vmatpush1.msra.mxu0 0.0
  %223 = vmatprep.subr.mxu0 0.0
  %224 = vmatpush1.msra.mxu0 0.0
  %225 = vmatprep.subr.mxu0 0.0
  %226 = vmatpush1.msra.mxu0 0.0
  %227 = vmatprep.subr.mxu0 0.0
  %228 = vmatpush1.msra.mxu0 0.0
  %229 = vmatprep.subr.mxu0 0.0
  %230 = vmatpush1.msra.mxu0 0.0
  %231 = vmatprep.subr.mxu0 0.0
  %232 = vmatpush1.msra.mxu0 0.0
  %233 = vmatprep.subr.mxu0 0.0
  %234 = vmatpush1.msra.mxu0 0.0
  %235 = vmatprep.subr.mxu0 0.0
  %236 = vmatpush1.msra.mxu0 0.0
  %237 = vmatprep.mubr.f32.mxu0 0.0
  %238 = vmatmul.mubr.f32.gmra.mrb[0].mxu0 %v78
  %v239 = vpop.f32.mrb[0].mxu0
  %v240 = vadd.f32 %v74, %v239
  %v241 = vpop.f32.mrb[0].mxu0
  %242 = vmatprep.mubr.f32.mxu0 0.0
  %243 = vmatmul.mubr.f32.gmra.mrb[0].mxu0 %v81
  %v244 = vpop.f32.mrb[0].mxu0
  %v245 = vadd.f32 %v74, %v244
  %v246 = vpop.f32.mrb[0].mxu0
  %247 = vmatprep.mubr.f32.mxu0 0.0
  %248 = vmatmul.mubr.f32.gmra.mrb[0].mxu0 %v84
  %v249 = vpop.f32.mrb[0].mxu0
  %v250 = vadd.f32 %v74, %v249
  %v251 = vpop.f32.mrb[0].mxu0
  %252 = vmatprep.mubr.f32.mxu0 0.0
  %253 = vmatmul.mubr.f32.gmra.mrb[0].mxu0 %v87
  %v254 = vpop.f32.mrb[0].mxu0
  %v255 = vadd.f32 %v74, %v254
  %v256 = vpop.f32.mrb[0].mxu0
  %257 = vmatprep.mubr.f32.mxu0 0.0
  %258 = vmatmul.mubr.f32.gmra.mrb[0].mxu0 %v90
  %v259 = vpop.f32.mrb[0].mxu0
  %v260 = vadd.f32 %v74, %v259
  %v261 = vpop.f32.mrb[0].mxu0
  %262 = vmatprep.mubr.f32.mxu0 0.0
  %263 = vmatmul.mubr.f32.gmra.mrb[0].mxu0 %v93
  %v264 = vpop.f32.mrb[0].mxu0
  %v265 = vadd.f32 %v74, %v264
  %v266 = vpop.f32.mrb[0].mxu0
  %267 = vmatprep.mubr.f32.mxu0 0.0
  %268 = vmatmul.mubr.f32.gmra.mrb[0].mxu0 %v96
  %v269 = vpop.f32.mrb[0].mxu0
  %v270 = vadd.f32 %v74, %v269
  %v271 = vpop.f32.mrb[0].mxu0
  %272 = vmatprep.mubr.f32.mxu0 0.0
  %273 = vmatmul.mubr.f32.gmra.mrb[0].mxu0 %v99
  %v274 = vpop.f32.mrb[0].mxu0
  %v275 = vadd.f32 %v74, %v274
  %v276 = vpop.f32.mrb[0].mxu0
  %277 = vmatprep.mubr.f32.mxu0 0.0
  %278 = vmatmul.mubr.f32.gmra.mrb[0].mxu0 %v102
  %v279 = vpop.f32.mrb[0].mxu0
  %v280 = vadd.f32 %v74, %v279
  %v281 = vpop.f32.mrb[0].mxu0
  %282 = vmatprep.mubr.f32.mxu0 0.0
  %283 = vmatmul.mubr.f32.gmra.mrb[0].mxu0 %v105
  %v284 = vpop.f32.mrb[0].mxu0
  %v285 = vadd.f32 %v74, %v284
  %v286 = vpop.f32.mrb[0].mxu0
  %287 = vmatprep.mubr.f32.mxu0 0.0
  %288 = vmatmul.mubr.f32.gmra.mrb[0].mxu0 %v108
  %v289 = vpop.f32.mrb[0].mxu0
  %v290 = vadd.f32 %v74, %v289
  %v291 = vpop.f32.mrb[0].mxu0
  %292 = vmatprep.mubr.f32.mxu0 0.0
  %293 = vmatmul.mubr.f32.gmra.mrb[0].mxu0 %v111
  %v294 = vpop.f32.mrb[0].mxu0
  %v295 = vadd.f32 %v74, %v294
  %v296 = vpop.f32.mrb[0].mxu0
  %297 = vmatprep.mubr.f32.mxu0 0.0
  %298 = vmatmul.mubr.f32.gmra.mrb[0].mxu0 %v114
  %v299 = vpop.f32.mrb[0].mxu0
  %v300 = vadd.f32 %v74, %v299
  %v301 = vpop.f32.mrb[0].mxu0
  %302 = vmatprep.mubr.f32.mxu0 0.0
  %303 = vmatmul.mubr.f32.gmra.mrb[0].mxu0 %v117
  %v304 = vpop.f32.mrb[0].mxu0
  %v305 = vadd.f32 %v74, %v304
  %v306 = vpop.f32.mrb[0].mxu0
  %307 = vmatprep.mubr.f32.mxu0 0.0
  %308 = vmatmul.mubr.f32.gmra.mrb[0].mxu0 %v120
  %v309 = vpop.f32.mrb[0].mxu0
  %v310 = vadd.f32 %v74, %v309
  %v311 = vpop.f32.mrb[0].mxu0
  %312 = vmatprep.mubr.f32.mxu0 0.0
  %313 = vmatmul.mubr.f32.gmra.mrb[0].mxu0 %v123
  %v314 = vpop.f32.mrb[0].mxu0
  %v315 = vadd.f32 %v74, %v314
  %v316 = vpop.f32.mrb[0].mxu0
  %317 = vmatprep.mubr.f32.mxu0 0.0
  %318 = vmatmul.mubr.f32.gmra.mrb[0].mxu0 %v126
  %v319 = vpop.f32.mrb[0].mxu0
  %v320 = vadd.f32 %v74, %v319
  %v321 = vpop.f32.mrb[0].mxu0
  %322 = vmatprep.mubr.f32.mxu0 0.0
  %323 = vmatmul.mubr.f32.gmra.mrb[0].mxu0 %v129
  %v324 = vpop.f32.mrb[0].mxu0
  %v325 = vadd.f32 %v74, %v324
  %v326 = vpop.f32.mrb[0].mxu0
  %327 = vmatprep.mubr.f32.mxu0 0.0
  %328 = vmatmul.mubr.f32.gmra.mrb[0].mxu0 %v132
  %v329 = vpop.f32.mrb[0].mxu0
  %v330 = vadd.f32 %v74, %v329
  %v331 = vpop.f32.mrb[0].mxu0
  %332 = vmatprep.mubr.f32.mxu0 0.0
  %333 = vmatmul.mubr.f32.gmra.mrb[0].mxu0 %v135
  %v334 = vpop.f32.mrb[0].mxu0
  %v335 = vadd.f32 %v74, %v334
  %v336 = vpop.f32.mrb[0].mxu0
  %337 = vmatprep.mubr.f32.mxu0 0.0
  %338 = vmatmul.mubr.f32.gmra.mrb[0].mxu0 %v138
  %v339 = vpop.f32.mrb[0].mxu0
  %v340 = vadd.f32 %v74, %v339
  %v341 = vpop.f32.mrb[0].mxu0
  %342 = vmatprep.mubr.f32.mxu0 0.0
  %343 = vmatmul.mubr.f32.gmra.mrb[0].mxu0 %v141
  %v344 = vpop.f32.mrb[0].mxu0
  %v345 = vadd.f32 %v74, %v344
  %v346 = vpop.f32.mrb[0].mxu0
  %347 = vmatprep.mubr.f32.mxu0 0.0
  %348 = vmatmul.mubr.f32.gmra.mrb[0].mxu0 %v144
  %v349 = vpop.f32.mrb[0].mxu0
  %v350 = vadd.f32 %v74, %v349
  %v351 = vpop.f32.mrb[0].mxu0
  %352 = vmatprep.mubr.f32.mxu0 0.0
  %353 = vmatmul.mubr.f32.gmra.mrb[0].mxu0 %v147
  %v354 = vpop.f32.mrb[0].mxu0
  %v355 = vadd.f32 %v74, %v354
  %v356 = vpop.f32.mrb[0].mxu0
  %357 = vmatprep.mubr.f32.mxu0 0.0
  %358 = vmatmul.mubr.f32.gmra.mrb[0].mxu0 %v150
  %v359 = vpop.f32.mrb[0].mxu0
  %v360 = vadd.f32 %v74, %v359
  %v361 = vpop.f32.mrb[0].mxu0
  %362 = vmatprep.mubr.f32.mxu0 0.0
  %363 = vmatmul.mubr.f32.gmra.mrb[0].mxu0 %v153
  %v364 = vpop.f32.mrb[0].mxu0
  %v365 = vadd.f32 %v74, %v364
  %v366 = vpop.f32.mrb[0].mxu0
  %367 = vmatprep.mubr.f32.mxu0 0.0
  %368 = vmatmul.mubr.f32.gmra.mrb[0].mxu0 %v156
  %v369 = vpop.f32.mrb[0].mxu0
  %v370 = vadd.f32 %v74, %v369
  %v371 = vpop.f32.mrb[0].mxu0
  %372 = vmatprep.mubr.f32.mxu0 0.0
  %373 = vmatmul.mubr.f32.gmra.mrb[0].mxu0 %v159
  %v374 = vpop.f32.mrb[0].mxu0
  %v375 = vadd.f32 %v74, %v374
  %v376 = vpop.f32.mrb[0].mxu0
  %377 = vmatprep.mubr.f32.mxu0 0.0
  %378 = vmatmul.mubr.f32.gmra.mrb[0].mxu0 %v162
  %v379 = vpop.f32.mrb[0].mxu0
  %v380 = vadd.f32 %v74, %v379
  %v381 = vpop.f32.mrb[0].mxu0
  %382 = vmatprep.mubr.f32.mxu0 0.0
  %383 = vmatmul.mubr.f32.gmra.mrb[0].mxu0 %v165
  %v384 = vpop.f32.mrb[0].mxu0
  %v385 = vadd.f32 %v74, %v384
  %v386 = vpop.f32.mrb[0].mxu0
  %387 = vmatprep.mubr.f32.mxu0 0.0
  %388 = vmatmul.mubr.f32.gmra.mrb[0].mxu0 %v168
  %v389 = vpop.f32.mrb[0].mxu0
  %v390 = vadd.f32 %v74, %v389
  %v391 = vpop.f32.mrb[0].mxu0
  %392 = vmatprep.mubr.f32.mxu0 0.0
  %393 = vmatmul.mubr.f32.gmra.mrb[0].mxu0 %v171
  %v394 = vpop.f32.mrb[0].mxu0
  %v395 = vadd.f32 %v74, %v394
  %v396 = vpop.f32.mrb[0].mxu0
  %397 = vdwg.mxu0
  %vm398 = vcmp.gt.f32.partialorder %v240, 0.0
  %vm399 = vcmp.gt.f32.partialorder %v245, 0.0
  %vm400 = vcmp.gt.f32.partialorder %v250, 0.0
  %vm401 = vcmp.gt.f32.partialorder %v255, 0.0
  %vm402 = vcmp.gt.f32.partialorder %v260, 0.0
  %vm403 = vcmp.gt.f32.partialorder %v265, 0.0
  %vm404 = vcmp.gt.f32.partialorder %v270, 0.0
  %vm405 = vcmp.gt.f32.partialorder %v275, 0.0
  %vm406 = vcmp.gt.f32.partialorder %v280, 0.0
  %vm407 = vcmp.gt.f32.partialorder %v285, 0.0
  %vm408 = vcmp.gt.f32.partialorder %v290, 0.0
  %vm409 = vcmp.gt.f32.partialorder %v295, 0.0
  %vm410 = vcmp.gt.f32.partialorder %v300, 0.0
  %vm411 = vcmp.gt.f32.partialorder %v305, 0.0
  %vm412 = vcmp.gt.f32.partialorder %v310, 0.0
  %vm413 = vcmp.gt.f32.partialorder %v315, 0.0
  %vm414 = vcmp.gt.f32.partialorder %v320, 0.0
  %vm415 = vcmp.gt.f32.partialorder %v325, 0.0
  %vm416 = vcmp.gt.f32.partialorder %v330, 0.0
  %vm417 = vcmp.gt.f32.partialorder %v335, 0.0
  %vm418 = vcmp.gt.f32.partialorder %v340, 0.0
  %vm419 = vcmp.gt.f32.partialorder %v345, 0.0
  %vm420 = vcmp.gt.f32.partialorder %v350, 0.0
  %vm421 = vcmp.gt.f32.partialorder %v355, 0.0
  %vm422 = vcmp.gt.f32.partialorder %v360, 0.0
  %vm423 = vcmp.gt.f32.partialorder %v365, 0.0
  %vm424 = vcmp.gt.f32.partialorder %v370, 0.0
  %vm425 = vcmp.gt.f32.partialorder %v375, 0.0
  %vm426 = vcmp.gt.f32.partialorder %v380, 0.0
  %vm427 = vcmp.gt.f32.partialorder %v385, 0.0
  %vm428 = vcmp.gt.f32.partialorder %v390, 0.0
  %vm429 = vcmp.gt.f32.partialorder %v395, 0.0
  %v430 = vmul.f32 %v240, 0.01
  %v431 = vmul.f32 %v245, 0.01
  %v432 = vmul.f32 %v250, 0.01
  %v433 = vmul.f32 %v255, 0.01
  %v434 = vmul.f32 %v260, 0.01
  %v435 = vmul.f32 %v265, 0.01
  %v436 = vmul.f32 %v270, 0.01
  %v437 = vmul.f32 %v275, 0.01
  %v438 = vmul.f32 %v280, 0.01
  %v439 = vmul.f32 %v285, 0.01
  %v440 = vmul.f32 %v290, 0.01
  %v441 = vmul.f32 %v295, 0.01
  %v442 = vmul.f32 %v300, 0.01
  %v443 = vmul.f32 %v305, 0.01
  %v444 = vmul.f32 %v310, 0.01
  %v445 = vmul.f32 %v315, 0.01
  %v446 = vmul.f32 %v320, 0.01
  %v447 = vmul.f32 %v325, 0.01
  %v448 = vmul.f32 %v330, 0.01
  %v449 = vmul.f32 %v335, 0.01
  %v450 = vmul.f32 %v340, 0.01
  %v451 = vmul.f32 %v345, 0.01
  %v452 = vmul.f32 %v350, 0.01
  %v453 = vmul.f32 %v355, 0.01
  %v454 = vmul.f32 %v360, 0.01
  %v455 = vmul.f32 %v365, 0.01
  %v456 = vmul.f32 %v370, 0.01
  %v457 = vmul.f32 %v375, 0.01
  %v458 = vmul.f32 %v380, 0.01
  %v459 = vmul.f32 %v385, 0.01
  %v460 = vmul.f32 %v390, 0.01
  %v461 = vmul.f32 %v395, 0.01
  %v462 = vsel %vm398, %v240, %v430
  %v463 = vsel %vm399, %v245, %v431
  %v464 = vsel %vm400, %v250, %v432
  %v465 = vsel %vm401, %v255, %v433
  %v466 = vsel %vm402, %v260, %v434
  %v467 = vsel %vm403, %v265, %v435
  %v468 = vsel %vm404, %v270, %v436
  %v469 = vsel %vm405, %v275, %v437
  %v470 = vsel %vm406, %v280, %v438
  %v471 = vsel %vm407, %v285, %v439
  %v472 = vsel %vm408, %v290, %v440
  %v473 = vsel %vm409, %v295, %v441
  %v474 = vsel %vm410, %v300, %v442
  %v475 = vsel %vm411, %v305, %v443
  %v476 = vsel %vm412, %v310, %v444
  %v477 = vsel %vm413, %v315, %v445
  %v478 = vsel %vm414, %v320, %v446
  %v479 = vsel %vm415, %v325, %v447
  %v480 = vsel %vm416, %v330, %v448
  %v481 = vsel %vm417, %v335, %v449
  %v482 = vsel %vm418, %v340, %v450
  %v483 = vsel %vm419, %v345, %v451
  %v484 = vsel %vm420, %v350, %v452
  %v485 = vsel %vm421, %v355, %v453
  %v486 = vsel %vm422, %v360, %v454
  %v487 = vsel %vm423, %v365, %v455
  %v488 = vsel %vm424, %v370, %v456
  %v489 = vsel %vm425, %v375, %v457
  %v490 = vsel %vm426, %v380, %v458
  %v491 = vsel %vm427, %v385, %v459
  %v492 = vsel %vm428, %v390, %v460
  %v493 = vsel %vm429, %v395, %v461
  %v494 = vld [vmem:[%s5] sm:$0xff]
  %v495 = vld [vmem:[%s5 + $0x8] sm:$0xff]
  %v496 = vld [vmem:[%s5 + $0x10] sm:$0xff]
  %v497 = vld [vmem:[%s5 + $0x18] sm:$0xff]
  %v498 = vld [vmem:[%s5 + $0x20] sm:$0xff]
  %v499 = vld [vmem:[%s5 + $0x28] sm:$0xff]
  %v500 = vld [vmem:[%s5 + $0x30] sm:$0xff]
  %v501 = vld [vmem:[%s5 + $0x38] sm:$0xff]
  %v502 = vld [vmem:[%s6] sm:$0x1]
  %v504 = vlaneseq
  %v505 = vshrl.u32 %v504, 7
  %v506 = vsub.s32 0, %v505
  %v507 = vrot.slane %v502, %v506
  %vm509 = vcmask 523264
  %v511 = vsel %vm509, %v462, 0
  %v514 = vsel %vm509, %v463, 0
  %v517 = vsel %vm509, %v464, 0
  %v520 = vsel %vm509, %v465, 0
  %v523 = vsel %vm509, %v466, 0
  %v526 = vsel %vm509, %v467, 0
  %v529 = vsel %vm509, %v468, 0
  %v532 = vsel %vm509, %v469, 0
  %v535 = vsel %vm509, %v470, 0
  %v538 = vsel %vm509, %v471, 0
  %v541 = vsel %vm509, %v472, 0
  %v544 = vsel %vm509, %v473, 0
  %v547 = vsel %vm509, %v474, 0
  %v550 = vsel %vm509, %v475, 0
  %v553 = vsel %vm509, %v476, 0
  %v556 = vsel %vm509, %v477, 0
  %v559 = vsel %vm509, %v478, 0
  %v562 = vsel %vm509, %v479, 0
  %v565 = vsel %vm509, %v480, 0
  %v568 = vsel %vm509, %v481, 0
  %v571 = vsel %vm509, %v482, 0
  %v574 = vsel %vm509, %v483, 0
  %v577 = vsel %vm509, %v484, 0
  %v580 = vsel %vm509, %v485, 0
  %v583 = vsel %vm509, %v486, 0
  %v586 = vsel %vm509, %v487, 0
  %v589 = vsel %vm509, %v488, 0
  %v592 = vsel %vm509, %v489, 0
  %v595 = vsel %vm509, %v490, 0
  %v598 = vsel %vm509, %v491, 0
  %v601 = vsel %vm509, %v492, 0
  %v604 = vsel %vm509, %v493, 0
  %606 = vmatprep.subr.mxu0 0.0
  %607 = vmatpush1.msra.mxu0 %v494
  %608 = vmatprep.subr.mxu0 0.0
  %609 = vmatpush1.msra.mxu0 %v495
  %610 = vmatprep.subr.mxu0 0.0
  %611 = vmatpush1.msra.mxu0 %v496
  %612 = vmatprep.subr.mxu0 0.0
  %613 = vmatpush1.msra.mxu0 %v497
  %614 = vmatprep.subr.mxu0 0.0
  %615 = vmatpush1.msra.mxu0 %v498
  %616 = vmatprep.subr.mxu0 0.0
  %617 = vmatpush1.msra.mxu0 %v499
  %618 = vmatprep.subr.mxu0 0.0
  %619 = vmatpush1.msra.mxu0 %v500
  %620 = vmatprep.subr.mxu0 0.0
  %621 = vmatpush1.msra.mxu0 %v501
  %622 = vmatprep.subr.mxu0 0.0
  %623 = vmatpush1.msra.mxu0 0.0
  %624 = vmatprep.subr.mxu0 0.0
  %625 = vmatpush1.msra.mxu0 0.0
  %626 = vmatprep.subr.mxu0 0.0
  %627 = vmatpush1.msra.mxu0 0.0
  %628 = vmatprep.subr.mxu0 0.0
  %629 = vmatpush1.msra.mxu0 0.0
  %630 = vmatprep.subr.mxu0 0.0
  %631 = vmatpush1.msra.mxu0 0.0
  %632 = vmatprep.subr.mxu0 0.0
  %633 = vmatpush1.msra.mxu0 0.0
  %634 = vmatprep.subr.mxu0 0.0
  %635 = vmatpush1.msra.mxu0 0.0
  %636 = vmatprep.subr.mxu0 0.0
  %637 = vmatpush1.msra.mxu0 0.0
  %638 = vmatprep.subr.mxu0 0.0
  %639 = vmatpush1.msra.mxu0 0.0
  %640 = vmatprep.subr.mxu0 0.0
  %641 = vmatpush1.msra.mxu0 0.0
  %642 = vmatprep.subr.mxu0 0.0
  %643 = vmatpush1.msra.mxu0 0.0
  %644 = vmatprep.subr.mxu0 0.0
  %645 = vmatpush1.msra.mxu0 0.0
  %646 = vmatprep.subr.mxu0 0.0
  %647 = vmatpush1.msra.mxu0 0.0
  %648 = vmatprep.subr.mxu0 0.0
  %649 = vmatpush1.msra.mxu0 0.0
  %650 = vmatprep.subr.mxu0 0.0
  %651 = vmatpush1.msra.mxu0 0.0
  %652 = vmatprep.subr.mxu0 0.0
  %653 = vmatpush1.msra.mxu0 0.0
  %654 = vmatprep.subr.mxu0 0.0
  %655 = vmatpush1.msra.mxu0 0.0
  %656 = vmatprep.subr.mxu0 0.0
  %657 = vmatpush1.msra.mxu0 0.0
  %658 = vmatprep.subr.mxu0 0.0
  %659 = vmatpush1.msra.mxu0 0.0
  %660 = vmatprep.subr.mxu0 0.0
  %661 = vmatpush1.msra.mxu0 0.0
  %662 = vmatprep.subr.mxu0 0.0
  %663 = vmatpush1.msra.mxu0 0.0
  %664 = vmatprep.subr.mxu0 0.0
  %665 = vmatpush1.msra.mxu0 0.0
  %666 = vmatprep.subr.mxu0 0.0
  %667 = vmatpush1.msra.mxu0 0.0
  %668 = vmatprep.subr.mxu0 0.0
  %669 = vmatpush1.msra.mxu0 0.0
  %670 = vmatprep.mubr.f32.mxu0 0.0
  %671 = vmatmul.mubr.f32.gmra.mrb[0].mxu0 %v511
  %v672 = vpop.f32.mrb[0].mxu0
  %v673 = vadd.f32 %v507, %v672
  %v674 = vpop.f32.mrb[0].mxu0
  %675 = vmatprep.mubr.f32.mxu0 0.0
  %676 = vmatmul.mubr.f32.gmra.mrb[0].mxu0 %v514
  %v677 = vpop.f32.mrb[0].mxu0
  %v678 = vadd.f32 %v507, %v677
  %v679 = vpop.f32.mrb[0].mxu0
  %680 = vmatprep.mubr.f32.mxu0 0.0
  %681 = vmatmul.mubr.f32.gmra.mrb[0].mxu0 %v517
  %v682 = vpop.f32.mrb[0].mxu0
  %v683 = vadd.f32 %v507, %v682
  %v684 = vpop.f32.mrb[0].mxu0
  %685 = vmatprep.mubr.f32.mxu0 0.0
  %686 = vmatmul.mubr.f32.gmra.mrb[0].mxu0 %v520
  %v687 = vpop.f32.mrb[0].mxu0
  %v688 = vadd.f32 %v507, %v687
  %v689 = vpop.f32.mrb[0].mxu0
  %690 = vmatprep.mubr.f32.mxu0 0.0
  %691 = vmatmul.mubr.f32.gmra.mrb[0].mxu0 %v523
  %v692 = vpop.f32.mrb[0].mxu0
  %v693 = vadd.f32 %v507, %v692
  %v694 = vpop.f32.mrb[0].mxu0
  %695 = vmatprep.mubr.f32.mxu0 0.0
  %696 = vmatmul.mubr.f32.gmra.mrb[0].mxu0 %v526
  %v697 = vpop.f32.mrb[0].mxu0
  %v698 = vadd.f32 %v507, %v697
  %v699 = vpop.f32.mrb[0].mxu0
  %700 = vmatprep.mubr.f32.mxu0 0.0
  %701 = vmatmul.mubr.f32.gmra.mrb[0].mxu0 %v529
  %v702 = vpop.f32.mrb[0].mxu0
  %v703 = vadd.f32 %v507, %v702
  %v704 = vpop.f32.mrb[0].mxu0
  %705 = vmatprep.mubr.f32.mxu0 0.0
  %706 = vmatmul.mubr.f32.gmra.mrb[0].mxu0 %v532
  %v707 = vpop.f32.mrb[0].mxu0
  %v708 = vadd.f32 %v507, %v707
  %v709 = vpop.f32.mrb[0].mxu0
  %710 = vmatprep.mubr.f32.mxu0 0.0
  %711 = vmatmul.mubr.f32.gmra.mrb[0].mxu0 %v535
  %v712 = vpop.f32.mrb[0].mxu0
  %v713 = vadd.f32 %v507, %v712
  %v714 = vpop.f32.mrb[0].mxu0
  %715 = vmatprep.mubr.f32.mxu0 0.0
  %716 = vmatmul.mubr.f32.gmra.mrb[0].mxu0 %v538
  %v717 = vpop.f32.mrb[0].mxu0
  %v718 = vadd.f32 %v507, %v717
  %v719 = vpop.f32.mrb[0].mxu0
  %720 = vmatprep.mubr.f32.mxu0 0.0
  %721 = vmatmul.mubr.f32.gmra.mrb[0].mxu0 %v541
  %v722 = vpop.f32.mrb[0].mxu0
  %v723 = vadd.f32 %v507, %v722
  %v724 = vpop.f32.mrb[0].mxu0
  %725 = vmatprep.mubr.f32.mxu0 0.0
  %726 = vmatmul.mubr.f32.gmra.mrb[0].mxu0 %v544
  %v727 = vpop.f32.mrb[0].mxu0
  %v728 = vadd.f32 %v507, %v727
  %v729 = vpop.f32.mrb[0].mxu0
  %730 = vmatprep.mubr.f32.mxu0 0.0
  %731 = vmatmul.mubr.f32.gmra.mrb[0].mxu0 %v547
  %v732 = vpop.f32.mrb[0].mxu0
  %v733 = vadd.f32 %v507, %v732
  %v734 = vpop.f32.mrb[0].mxu0
  %735 = vmatprep.mubr.f32.mxu0 0.0
  %736 = vmatmul.mubr.f32.gmra.mrb[0].mxu0 %v550
  %v737 = vpop.f32.mrb[0].mxu0
  %v738 = vadd.f32 %v507, %v737
  %v739 = vpop.f32.mrb[0].mxu0
  %740 = vmatprep.mubr.f32.mxu0 0.0
  %741 = vmatmul.mubr.f32.gmra.mrb[0].mxu0 %v553
  %v742 = vpop.f32.mrb[0].mxu0
  %v743 = vadd.f32 %v507, %v742
  %v744 = vpop.f32.mrb[0].mxu0
  %745 = vmatprep.mubr.f32.mxu0 0.0
  %746 = vmatmul.mubr.f32.gmra.mrb[0].mxu0 %v556
  %v747 = vpop.f32.mrb[0].mxu0
  %v748 = vadd.f32 %v507, %v747
  %v749 = vpop.f32.mrb[0].mxu0
  %750 = vmatprep.mubr.f32.mxu0 0.0
  %751 = vmatmul.mubr.f32.gmra.mrb[0].mxu0 %v559
  %v752 = vpop.f32.mrb[0].mxu0
  %v753 = vadd.f32 %v507, %v752
  %v754 = vpop.f32.mrb[0].mxu0
  %755 = vmatprep.mubr.f32.mxu0 0.0
  %756 = vmatmul.mubr.f32.gmra.mrb[0].mxu0 %v562
  %v757 = vpop.f32.mrb[0].mxu0
  %v758 = vadd.f32 %v507, %v757
  %v759 = vpop.f32.mrb[0].mxu0
  %760 = vmatprep.mubr.f32.mxu0 0.0
  %761 = vmatmul.mubr.f32.gmra.mrb[0].mxu0 %v565
  %v762 = vpop.f32.mrb[0].mxu0
  %v763 = vadd.f32 %v507, %v762
  %v764 = vpop.f32.mrb[0].mxu0
  %765 = vmatprep.mubr.f32.mxu0 0.0
  %766 = vmatmul.mubr.f32.gmra.mrb[0].mxu0 %v568
  %v767 = vpop.f32.mrb[0].mxu0
  %v768 = vadd.f32 %v507, %v767
  %v769 = vpop.f32.mrb[0].mxu0
  %770 = vmatprep.mubr.f32.mxu0 0.0
  %771 = vmatmul.mubr.f32.gmra.mrb[0].mxu0 %v571
  %v772 = vpop.f32.mrb[0].mxu0
  %v773 = vadd.f32 %v507, %v772
  %v774 = vpop.f32.mrb[0].mxu0
  %775 = vmatprep.mubr.f32.mxu0 0.0
  %776 = vmatmul.mubr.f32.gmra.mrb[0].mxu0 %v574
  %v777 = vpop.f32.mrb[0].mxu0
  %v778 = vadd.f32 %v507, %v777
  %v779 = vpop.f32.mrb[0].mxu0
  %780 = vmatprep.mubr.f32.mxu0 0.0
  %781 = vmatmul.mubr.f32.gmra.mrb[0].mxu0 %v577
  %v782 = vpop.f32.mrb[0].mxu0
  %v783 = vadd.f32 %v507, %v782
  %v784 = vpop.f32.mrb[0].mxu0
  %785 = vmatprep.mubr.f32.mxu0 0.0
  %786 = vmatmul.mubr.f32.gmra.mrb[0].mxu0 %v580
  %v787 = vpop.f32.mrb[0].mxu0
  %v788 = vadd.f32 %v507, %v787
  %v789 = vpop.f32.mrb[0].mxu0
  %790 = vmatprep.mubr.f32.mxu0 0.0
  %791 = vmatmul.mubr.f32.gmra.mrb[0].mxu0 %v583
  %v792 = vpop.f32.mrb[0].mxu0
  %v793 = vadd.f32 %v507, %v792
  %v794 = vpop.f32.mrb[0].mxu0
  %795 = vmatprep.mubr.f32.mxu0 0.0
  %796 = vmatmul.mubr.f32.gmra.mrb[0].mxu0 %v586
  %v797 = vpop.f32.mrb[0].mxu0
  %v798 = vadd.f32 %v507, %v797
  %v799 = vpop.f32.mrb[0].mxu0
  %800 = vmatprep.mubr.f32.mxu0 0.0
  %801 = vmatmul.mubr.f32.gmra.mrb[0].mxu0 %v589
  %v802 = vpop.f32.mrb[0].mxu0
  %v803 = vadd.f32 %v507, %v802
  %v804 = vpop.f32.mrb[0].mxu0
  %805 = vmatprep.mubr.f32.mxu0 0.0
  %806 = vmatmul.mubr.f32.gmra.mrb[0].mxu0 %v592
  %v807 = vpop.f32.mrb[0].mxu0
  %v808 = vadd.f32 %v507, %v807
  %v809 = vpop.f32.mrb[0].mxu0
  %810 = vmatprep.mubr.f32.mxu0 0.0
  %811 = vmatmul.mubr.f32.gmra.mrb[0].mxu0 %v595
  %v812 = vpop.f32.mrb[0].mxu0
  %v813 = vadd.f32 %v507, %v812
  %v814 = vpop.f32.mrb[0].mxu0
  %815 = vmatprep.mubr.f32.mxu0 0.0
  %816 = vmatmul.mubr.f32.gmra.mrb[0].mxu0 %v598
  %v817 = vpop.f32.mrb[0].mxu0
  %v818 = vadd.f32 %v507, %v817
  %v819 = vpop.f32.mrb[0].mxu0
  %820 = vmatprep.mubr.f32.mxu0 0.0
  %821 = vmatmul.mubr.f32.gmra.mrb[0].mxu0 %v601
  %v822 = vpop.f32.mrb[0].mxu0
  %v823 = vadd.f32 %v507, %v822
  %v824 = vpop.f32.mrb[0].mxu0
  %825 = vmatprep.mubr.f32.mxu0 0.0
  %826 = vmatmul.mubr.f32.gmra.mrb[0].mxu0 %v604
  %v827 = vpop.f32.mrb[0].mxu0
  %v828 = vadd.f32 %v507, %v827
  %v829 = vpop.f32.mrb[0].mxu0
  %830 = vdwg.mxu0
  %vm831 = vcmp.gt.f32.partialorder %v673, 0.0
  %vm832 = vcmp.gt.f32.partialorder %v678, 0.0
  %vm833 = vcmp.gt.f32.partialorder %v683, 0.0
  %vm834 = vcmp.gt.f32.partialorder %v688, 0.0
  %vm835 = vcmp.gt.f32.partialorder %v693, 0.0
  %vm836 = vcmp.gt.f32.partialorder %v698, 0.0
  %vm837 = vcmp.gt.f32.partialorder %v703, 0.0
  %vm838 = vcmp.gt.f32.partialorder %v708, 0.0
  %vm839 = vcmp.gt.f32.partialorder %v713, 0.0
  %vm840 = vcmp.gt.f32.partialorder %v718, 0.0
  %vm841 = vcmp.gt.f32.partialorder %v723, 0.0
  %vm842 = vcmp.gt.f32.partialorder %v728, 0.0
  %vm843 = vcmp.gt.f32.partialorder %v733, 0.0
  %vm844 = vcmp.gt.f32.partialorder %v738, 0.0
  %vm845 = vcmp.gt.f32.partialorder %v743, 0.0
  %vm846 = vcmp.gt.f32.partialorder %v748, 0.0
  %vm847 = vcmp.gt.f32.partialorder %v753, 0.0
  %vm848 = vcmp.gt.f32.partialorder %v758, 0.0
  %vm849 = vcmp.gt.f32.partialorder %v763, 0.0
  %vm850 = vcmp.gt.f32.partialorder %v768, 0.0
  %vm851 = vcmp.gt.f32.partialorder %v773, 0.0
  %vm852 = vcmp.gt.f32.partialorder %v778, 0.0
  %vm853 = vcmp.gt.f32.partialorder %v783, 0.0
  %vm854 = vcmp.gt.f32.partialorder %v788, 0.0
  %vm855 = vcmp.gt.f32.partialorder %v793, 0.0
  %vm856 = vcmp.gt.f32.partialorder %v798, 0.0
  %vm857 = vcmp.gt.f32.partialorder %v803, 0.0
  %vm858 = vcmp.gt.f32.partialorder %v808, 0.0
  %vm859 = vcmp.gt.f32.partialorder %v813, 0.0
  %vm860 = vcmp.gt.f32.partialorder %v818, 0.0
  %vm861 = vcmp.gt.f32.partialorder %v823, 0.0
  %vm862 = vcmp.gt.f32.partialorder %v828, 0.0
  %v863 = vmul.f32 %v673, 0.01
  %v864 = vmul.f32 %v678, 0.01
  %v865 = vmul.f32 %v683, 0.01
  %v866 = vmul.f32 %v688, 0.01
  %v867 = vmul.f32 %v693, 0.01
  %v868 = vmul.f32 %v698, 0.01
  %v869 = vmul.f32 %v703, 0.01
  %v870 = vmul.f32 %v708, 0.01
  %v871 = vmul.f32 %v713, 0.01
  %v872 = vmul.f32 %v718, 0.01
  %v873 = vmul.f32 %v723, 0.01
  %v874 = vmul.f32 %v728, 0.01
  %v875 = vmul.f32 %v733, 0.01
  %v876 = vmul.f32 %v738, 0.01
  %v877 = vmul.f32 %v743, 0.01
  %v878 = vmul.f32 %v748, 0.01
  %v879 = vmul.f32 %v753, 0.01
  %v880 = vmul.f32 %v758, 0.01
  %v881 = vmul.f32 %v763, 0.01
  %v882 = vmul.f32 %v768, 0.01
  %v883 = vmul.f32 %v773, 0.01
  %v884 = vmul.f32 %v778, 0.01
  %v885 = vmul.f32 %v783, 0.01
  %v886 = vmul.f32 %v788, 0.01
  %v887 = vmul.f32 %v793, 0.01
  %v888 = vmul.f32 %v798, 0.01
  %v889 = vmul.f32 %v803, 0.01
  %v890 = vmul.f32 %v808, 0.01
  %v891 = vmul.f32 %v813, 0.01
  %v892 = vmul.f32 %v818, 0.01
  %v893 = vmul.f32 %v823, 0.01
  %v894 = vmul.f32 %v828, 0.01
  %v895 = vsel %vm831, %v673, %v863
  %v896 = vsel %vm832, %v678, %v864
  %v897 = vsel %vm833, %v683, %v865
  %v898 = vsel %vm834, %v688, %v866
  %v899 = vsel %vm835, %v693, %v867
  %v900 = vsel %vm836, %v698, %v868
  %v901 = vsel %vm837, %v703, %v869
  %v902 = vsel %vm838, %v708, %v870
  %v903 = vsel %vm839, %v713, %v871
  %v904 = vsel %vm840, %v718, %v872
  %v905 = vsel %vm841, %v723, %v873
  %v906 = vsel %vm842, %v728, %v874
  %v907 = vsel %vm843, %v733, %v875
  %v908 = vsel %vm844, %v738, %v876
  %v909 = vsel %vm845, %v743, %v877
  %v910 = vsel %vm846, %v748, %v878
  %v911 = vsel %vm847, %v753, %v879
  %v912 = vsel %vm848, %v758, %v880
  %v913 = vsel %vm849, %v763, %v881
  %v914 = vsel %vm850, %v768, %v882
  %v915 = vsel %vm851, %v773, %v883
  %v916 = vsel %vm852, %v778, %v884
  %v917 = vsel %vm853, %v783, %v885
  %v918 = vsel %vm854, %v788, %v886
  %v919 = vsel %vm855, %v793, %v887
  %v920 = vsel %vm856, %v798, %v888
  %v921 = vsel %vm857, %v803, %v889
  %v922 = vsel %vm858, %v808, %v890
  %v923 = vsel %vm859, %v813, %v891
  %v924 = vsel %vm860, %v818, %v892
  %v925 = vsel %vm861, %v823, %v893
  %v926 = vsel %vm862, %v828, %v894
  %v927 = vld [vmem:[%s7] sm:$0xff]
  %v928 = vld [vmem:[%s7 + $0x8] sm:$0xff]
  %v929 = vld [vmem:[%s7 + $0x10] sm:$0xff]
  %v930 = vld [vmem:[%s7 + $0x18] sm:$0xff]
  %v931 = vld [vmem:[%s7 + $0x20] sm:$0xff]
  %v932 = vld [vmem:[%s7 + $0x28] sm:$0xff]
  %v933 = vld [vmem:[%s7 + $0x30] sm:$0xff]
  %v934 = vld [vmem:[%s7 + $0x38] sm:$0xff]
  %v935 = vld [vmem:[%s8] sm:$0x1]
  %v937 = vlaneseq
  %v938 = vshrl.u32 %v937, 7
  %v939 = vsub.s32 0, %v938
  %v940 = vrot.slane %v935, %v939
  %v943 = vsel %vm509, %v895, 0
  %v946 = vsel %vm509, %v896, 0
  %v949 = vsel %vm509, %v897, 0
  %v952 = vsel %vm509, %v898, 0
  %v955 = vsel %vm509, %v899, 0
  %v958 = vsel %vm509, %v900, 0
  %v961 = vsel %vm509, %v901, 0
  %v964 = vsel %vm509, %v902, 0
  %v967 = vsel %vm509, %v903, 0
  %v970 = vsel %vm509, %v904, 0
  %v973 = vsel %vm509, %v905, 0
  %v976 = vsel %vm509, %v906, 0
  %v979 = vsel %vm509, %v907, 0
  %v982 = vsel %vm509, %v908, 0
  %v985 = vsel %vm509, %v909, 0
  %v988 = vsel %vm509, %v910, 0
  %v991 = vsel %vm509, %v911, 0
  %v994 = vsel %vm509, %v912, 0
  %v997 = vsel %vm509, %v913, 0
  %v1000 = vsel %vm509, %v914, 0
  %v1003 = vsel %vm509, %v915, 0
  %v1006 = vsel %vm509, %v916, 0
  %v1009 = vsel %vm509, %v917, 0
  %v1012 = vsel %vm509, %v918, 0
  %v1015 = vsel %vm509, %v919, 0
  %v1018 = vsel %vm509, %v920, 0
  %v1021 = vsel %vm509, %v921, 0
  %v1024 = vsel %vm509, %v922, 0
  %v1027 = vsel %vm509, %v923, 0
  %v1030 = vsel %vm509, %v924, 0
  %v1033 = vsel %vm509, %v925, 0
  %v1036 = vsel %vm509, %v926, 0
  %1038 = vmatprep.subr.mxu0 0.0
  %1039 = vmatpush1.msra.mxu0 %v927
  %1040 = vmatprep.subr.mxu0 0.0
  %1041 = vmatpush1.msra.mxu0 %v928
  %1042 = vmatprep.subr.mxu0 0.0
  %1043 = vmatpush1.msra.mxu0 %v929
  %1044 = vmatprep.subr.mxu0 0.0
  %1045 = vmatpush1.msra.mxu0 %v930
  %1046 = vmatprep.subr.mxu0 0.0
  %1047 = vmatpush1.msra.mxu0 %v931
  %1048 = vmatprep.subr.mxu0 0.0
  %1049 = vmatpush1.msra.mxu0 %v932
  %1050 = vmatprep.subr.mxu0 0.0
  %1051 = vmatpush1.msra.mxu0 %v933
  %1052 = vmatprep.subr.mxu0 0.0
  %1053 = vmatpush1.msra.mxu0 %v934
  %1054 = vmatprep.subr.mxu0 0.0
  %1055 = vmatpush1.msra.mxu0 0.0
  %1056 = vmatprep.subr.mxu0 0.0
  %1057 = vmatpush1.msra.mxu0 0.0
  %1058 = vmatprep.subr.mxu0 0.0
  %1059 = vmatpush1.msra.mxu0 0.0
  %1060 = vmatprep.subr.mxu0 0.0
  %1061 = vmatpush1.msra.mxu0 0.0
  %1062 = vmatprep.subr.mxu0 0.0
  %1063 = vmatpush1.msra.mxu0 0.0
  %1064 = vmatprep.subr.mxu0 0.0
  %1065 = vmatpush1.msra.mxu0 0.0
  %1066 = vmatprep.subr.mxu0 0.0
  %1067 = vmatpush1.msra.mxu0 0.0
  %1068 = vmatprep.subr.mxu0 0.0
  %1069 = vmatpush1.msra.mxu0 0.0
  %1070 = vmatprep.subr.mxu0 0.0
  %1071 = vmatpush1.msra.mxu0 0.0
  %1072 = vmatprep.subr.mxu0 0.0
  %1073 = vmatpush1.msra.mxu0 0.0
  %1074 = vmatprep.subr.mxu0 0.0
  %1075 = vmatpush1.msra.mxu0 0.0
  %1076 = vmatprep.subr.mxu0 0.0
  %1077 = vmatpush1.msra.mxu0 0.0
  %1078 = vmatprep.subr.mxu0 0.0
  %1079 = vmatpush1.msra.mxu0 0.0
  %1080 = vmatprep.subr.mxu0 0.0
  %1081 = vmatpush1.msra.mxu0 0.0
  %1082 = vmatprep.subr.mxu0 0.0
  %1083 = vmatpush1.msra.mxu0 0.0
  %1084 = vmatprep.subr.mxu0 0.0
  %1085 = vmatpush1.msra.mxu0 0.0
  %1086 = vmatprep.subr.mxu0 0.0
  %1087 = vmatpush1.msra.mxu0 0.0
  %1088 = vmatprep.subr.mxu0 0.0
  %1089 = vmatpush1.msra.mxu0 0.0
  %1090 = vmatprep.subr.mxu0 0.0
  %1091 = vmatpush1.msra.mxu0 0.0
  %1092 = vmatprep.subr.mxu0 0.0
  %1093 = vmatpush1.msra.mxu0 0.0
  %1094 = vmatprep.subr.mxu0 0.0
  %1095 = vmatpush1.msra.mxu0 0.0
  %1096 = vmatprep.subr.mxu0 0.0
  %1097 = vmatpush1.msra.mxu0 0.0
  %1098 = vmatprep.subr.mxu0 0.0
  %1099 = vmatpush1.msra.mxu0 0.0
  %1100 = vmatprep.subr.mxu0 0.0
  %1101 = vmatpush1.msra.mxu0 0.0
  %1102 = vmatprep.mubr.f32.mxu0 0.0
  %1103 = vmatmul.mubr.f32.gmra.mrb[0].mxu0 %v943
  %v1104 = vpop.f32.mrb[0].mxu0
  %v1105 = vadd.f32 %v940, %v1104
  %v1106 = vpop.f32.mrb[0].mxu0
  %1107 = vmatprep.mubr.f32.mxu0 0.0
  %1108 = vmatmul.mubr.f32.gmra.mrb[0].mxu0 %v946
  %v1109 = vpop.f32.mrb[0].mxu0
  %v1110 = vadd.f32 %v940, %v1109
  %v1111 = vpop.f32.mrb[0].mxu0
  %1112 = vmatprep.mubr.f32.mxu0 0.0
  %1113 = vmatmul.mubr.f32.gmra.mrb[0].mxu0 %v949
  %v1114 = vpop.f32.mrb[0].mxu0
  %v1115 = vadd.f32 %v940, %v1114
  %v1116 = vpop.f32.mrb[0].mxu0
  %1117 = vmatprep.mubr.f32.mxu0 0.0
  %1118 = vmatmul.mubr.f32.gmra.mrb[0].mxu0 %v952
  %v1119 = vpop.f32.mrb[0].mxu0
  %v1120 = vadd.f32 %v940, %v1119
  %v1121 = vpop.f32.mrb[0].mxu0
  %1122 = vmatprep.mubr.f32.mxu0 0.0
  %1123 = vmatmul.mubr.f32.gmra.mrb[0].mxu0 %v955
  %v1124 = vpop.f32.mrb[0].mxu0
  %v1125 = vadd.f32 %v940, %v1124
  %v1126 = vpop.f32.mrb[0].mxu0
  %1127 = vmatprep.mubr.f32.mxu0 0.0
  %1128 = vmatmul.mubr.f32.gmra.mrb[0].mxu0 %v958
  %v1129 = vpop.f32.mrb[0].mxu0
  %v1130 = vadd.f32 %v940, %v1129
  %v1131 = vpop.f32.mrb[0].mxu0
  %1132 = vmatprep.mubr.f32.mxu0 0.0
  %1133 = vmatmul.mubr.f32.gmra.mrb[0].mxu0 %v961
  %v1134 = vpop.f32.mrb[0].mxu0
  %v1135 = vadd.f32 %v940, %v1134
  %v1136 = vpop.f32.mrb[0].mxu0
  %1137 = vmatprep.mubr.f32.mxu0 0.0
  %1138 = vmatmul.mubr.f32.gmra.mrb[0].mxu0 %v964
  %v1139 = vpop.f32.mrb[0].mxu0
  %v1140 = vadd.f32 %v940, %v1139
  %v1141 = vpop.f32.mrb[0].mxu0
  %1142 = vmatprep.mubr.f32.mxu0 0.0
  %1143 = vmatmul.mubr.f32.gmra.mrb[0].mxu0 %v967
  %v1144 = vpop.f32.mrb[0].mxu0
  %v1145 = vadd.f32 %v940, %v1144
  %v1146 = vpop.f32.mrb[0].mxu0
  %1147 = vmatprep.mubr.f32.mxu0 0.0
  %1148 = vmatmul.mubr.f32.gmra.mrb[0].mxu0 %v970
  %v1149 = vpop.f32.mrb[0].mxu0
  %v1150 = vadd.f32 %v940, %v1149
  %v1151 = vpop.f32.mrb[0].mxu0
  %1152 = vmatprep.mubr.f32.mxu0 0.0
  %1153 = vmatmul.mubr.f32.gmra.mrb[0].mxu0 %v973
  %v1154 = vpop.f32.mrb[0].mxu0
  %v1155 = vadd.f32 %v940, %v1154
  %v1156 = vpop.f32.mrb[0].mxu0
  %1157 = vmatprep.mubr.f32.mxu0 0.0
  %1158 = vmatmul.mubr.f32.gmra.mrb[0].mxu0 %v976
  %v1159 = vpop.f32.mrb[0].mxu0
  %v1160 = vadd.f32 %v940, %v1159
  %v1161 = vpop.f32.mrb[0].mxu0
  %1162 = vmatprep.mubr.f32.mxu0 0.0
  %1163 = vmatmul.mubr.f32.gmra.mrb[0].mxu0 %v979
  %v1164 = vpop.f32.mrb[0].mxu0
  %v1165 = vadd.f32 %v940, %v1164
  %v1166 = vpop.f32.mrb[0].mxu0
  %1167 = vmatprep.mubr.f32.mxu0 0.0
  %1168 = vmatmul.mubr.f32.gmra.mrb[0].mxu0 %v982
  %v1169 = vpop.f32.mrb[0].mxu0
  %v1170 = vadd.f32 %v940, %v1169
  %v1171 = vpop.f32.mrb[0].mxu0
  %1172 = vmatprep.mubr.f32.mxu0 0.0
  %1173 = vmatmul.mubr.f32.gmra.mrb[0].mxu0 %v985
  %v1174 = vpop.f32.mrb[0].mxu0
  %v1175 = vadd.f32 %v940, %v1174
  %v1176 = vpop.f32.mrb[0].mxu0
  %1177 = vmatprep.mubr.f32.mxu0 0.0
  %1178 = vmatmul.mubr.f32.gmra.mrb[0].mxu0 %v988
  %v1179 = vpop.f32.mrb[0].mxu0
  %v1180 = vadd.f32 %v940, %v1179
  %v1181 = vpop.f32.mrb[0].mxu0
  %1182 = vmatprep.mubr.f32.mxu0 0.0
  %1183 = vmatmul.mubr.f32.gmra.mrb[0].mxu0 %v991
  %v1184 = vpop.f32.mrb[0].mxu0
  %v1185 = vadd.f32 %v940, %v1184
  %v1186 = vpop.f32.mrb[0].mxu0
  %1187 = vmatprep.mubr.f32.mxu0 0.0
  %1188 = vmatmul.mubr.f32.gmra.mrb[0].mxu0 %v994
  %v1189 = vpop.f32.mrb[0].mxu0
  %v1190 = vadd.f32 %v940, %v1189
  %v1191 = vpop.f32.mrb[0].mxu0
  %1192 = vmatprep.mubr.f32.mxu0 0.0
  %1193 = vmatmul.mubr.f32.gmra.mrb[0].mxu0 %v997
  %v1194 = vpop.f32.mrb[0].mxu0
  %v1195 = vadd.f32 %v940, %v1194
  %v1196 = vpop.f32.mrb[0].mxu0
  %1197 = vmatprep.mubr.f32.mxu0 0.0
  %1198 = vmatmul.mubr.f32.gmra.mrb[0].mxu0 %v1000
  %v1199 = vpop.f32.mrb[0].mxu0
  %v1200 = vadd.f32 %v940, %v1199
  %v1201 = vpop.f32.mrb[0].mxu0
  %1202 = vmatprep.mubr.f32.mxu0 0.0
  %1203 = vmatmul.mubr.f32.gmra.mrb[0].mxu0 %v1003
  %v1204 = vpop.f32.mrb[0].mxu0
  %v1205 = vadd.f32 %v940, %v1204
  %v1206 = vpop.f32.mrb[0].mxu0
  %1207 = vmatprep.mubr.f32.mxu0 0.0
  %1208 = vmatmul.mubr.f32.gmra.mrb[0].mxu0 %v1006
  %v1209 = vpop.f32.mrb[0].mxu0
  %v1210 = vadd.f32 %v940, %v1209
  %v1211 = vpop.f32.mrb[0].mxu0
  %1212 = vmatprep.mubr.f32.mxu0 0.0
  %1213 = vmatmul.mubr.f32.gmra.mrb[0].mxu0 %v1009
  %v1214 = vpop.f32.mrb[0].mxu0
  %v1215 = vadd.f32 %v940, %v1214
  %v1216 = vpop.f32.mrb[0].mxu0
  %1217 = vmatprep.mubr.f32.mxu0 0.0
  %1218 = vmatmul.mubr.f32.gmra.mrb[0].mxu0 %v1012
  %v1219 = vpop.f32.mrb[0].mxu0
  %v1220 = vadd.f32 %v940, %v1219
  %v1221 = vpop.f32.mrb[0].mxu0
  %1222 = vmatprep.mubr.f32.mxu0 0.0
  %1223 = vmatmul.mubr.f32.gmra.mrb[0].mxu0 %v1015
  %v1224 = vpop.f32.mrb[0].mxu0
  %v1225 = vadd.f32 %v940, %v1224
  %v1226 = vpop.f32.mrb[0].mxu0
  %1227 = vmatprep.mubr.f32.mxu0 0.0
  %1228 = vmatmul.mubr.f32.gmra.mrb[0].mxu0 %v1018
  %v1229 = vpop.f32.mrb[0].mxu0
  %v1230 = vadd.f32 %v940, %v1229
  %v1231 = vpop.f32.mrb[0].mxu0
  %1232 = vmatprep.mubr.f32.mxu0 0.0
  %1233 = vmatmul.mubr.f32.gmra.mrb[0].mxu0 %v1021
  %v1234 = vpop.f32.mrb[0].mxu0
  %v1235 = vadd.f32 %v940, %v1234
  %v1236 = vpop.f32.mrb[0].mxu0
  %1237 = vmatprep.mubr.f32.mxu0 0.0
  %1238 = vmatmul.mubr.f32.gmra.mrb[0].mxu0 %v1024
  %v1239 = vpop.f32.mrb[0].mxu0
  %v1240 = vadd.f32 %v940, %v1239
  %v1241 = vpop.f32.mrb[0].mxu0
  %1242 = vmatprep.mubr.f32.mxu0 0.0
  %1243 = vmatmul.mubr.f32.gmra.mrb[0].mxu0 %v1027
  %v1244 = vpop.f32.mrb[0].mxu0
  %v1245 = vadd.f32 %v940, %v1244
  %v1246 = vpop.f32.mrb[0].mxu0
  %1247 = vmatprep.mubr.f32.mxu0 0.0
  %1248 = vmatmul.mubr.f32.gmra.mrb[0].mxu0 %v1030
  %v1249 = vpop.f32.mrb[0].mxu0
  %v1250 = vadd.f32 %v940, %v1249
  %v1251 = vpop.f32.mrb[0].mxu0
  %1252 = vmatprep.mubr.f32.mxu0 0.0
  %1253 = vmatmul.mubr.f32.gmra.mrb[0].mxu0 %v1033
  %v1254 = vpop.f32.mrb[0].mxu0
  %v1255 = vadd.f32 %v940, %v1254
  %v1256 = vpop.f32.mrb[0].mxu0
  %1257 = vmatprep.mubr.f32.mxu0 0.0
  %1258 = vmatmul.mubr.f32.gmra.mrb[0].mxu0 %v1036
  %v1259 = vpop.f32.mrb[0].mxu0
  %v1260 = vadd.f32 %v940, %v1259
  %v1261 = vpop.f32.mrb[0].mxu0
  %1262 = vdwg.mxu0
  %v1264 = vlaneseq
  %v1265 = vshrl.u32 %v1264, 7
  %v1266 = vsub.s32 0, %v1265
  %v1267 = vrot.slane %v67, %v1266
  %v1269 = vmul.f32 %v1105, %v1267
  %v1270 = vmul.f32 %v1110, %v1267
  %v1271 = vmul.f32 %v1115, %v1267
  %v1272 = vmul.f32 %v1120, %v1267
  %v1273 = vmul.f32 %v1125, %v1267
  %v1274 = vmul.f32 %v1130, %v1267
  %v1275 = vmul.f32 %v1135, %v1267
  %v1276 = vmul.f32 %v1140, %v1267
  %v1277 = vmul.f32 %v1145, %v1267
  %v1278 = vmul.f32 %v1150, %v1267
  %v1279 = vmul.f32 %v1155, %v1267
  %v1280 = vmul.f32 %v1160, %v1267
  %v1281 = vmul.f32 %v1165, %v1267
  %v1282 = vmul.f32 %v1170, %v1267
  %v1283 = vmul.f32 %v1175, %v1267
  %v1284 = vmul.f32 %v1180, %v1267
  %v1285 = vmul.f32 %v1185, %v1267
  %v1286 = vmul.f32 %v1190, %v1267
  %v1287 = vmul.f32 %v1195, %v1267
  %v1288 = vmul.f32 %v1200, %v1267
  %v1289 = vmul.f32 %v1205, %v1267
  %v1290 = vmul.f32 %v1210, %v1267
  %v1291 = vmul.f32 %v1215, %v1267
  %v1292 = vmul.f32 %v1220, %v1267
  %v1293 = vmul.f32 %v1225, %v1267
  %v1294 = vmul.f32 %v1230, %v1267
  %v1295 = vmul.f32 %v1235, %v1267
  %v1296 = vmul.f32 %v1240, %v1267
  %v1297 = vmul.f32 %v1245, %v1267
  %v1298 = vmul.f32 %v1250, %v1267
  %v1299 = vmul.f32 %v1255, %v1267
  %v1300 = vmul.f32 %v1260, %v1267
  %v1301 = vmax.f32 %v1269, -5.0
  %v1302 = vmax.f32 %v1270, -5.0
  %v1303 = vmax.f32 %v1271, -5.0
  %v1304 = vmax.f32 %v1272, -5.0
  %v1305 = vmax.f32 %v1273, -5.0
  %v1306 = vmax.f32 %v1274, -5.0
  %v1307 = vmax.f32 %v1275, -5.0
  %v1308 = vmax.f32 %v1276, -5.0
  %v1309 = vmax.f32 %v1277, -5.0
  %v1310 = vmax.f32 %v1278, -5.0
  %v1311 = vmax.f32 %v1279, -5.0
  %v1312 = vmax.f32 %v1280, -5.0
  %v1313 = vmax.f32 %v1281, -5.0
  %v1314 = vmax.f32 %v1282, -5.0
  %v1315 = vmax.f32 %v1283, -5.0
  %v1316 = vmax.f32 %v1284, -5.0
  %v1317 = vmax.f32 %v1285, -5.0
  %v1318 = vmax.f32 %v1286, -5.0
  %v1319 = vmax.f32 %v1287, -5.0
  %v1320 = vmax.f32 %v1288, -5.0
  %v1321 = vmax.f32 %v1289, -5.0
  %v1322 = vmax.f32 %v1290, -5.0
  %v1323 = vmax.f32 %v1291, -5.0
  %v1324 = vmax.f32 %v1292, -5.0
  %v1325 = vmax.f32 %v1293, -5.0
  %v1326 = vmax.f32 %v1294, -5.0
  %v1327 = vmax.f32 %v1295, -5.0
  %v1328 = vmax.f32 %v1296, -5.0
  %v1329 = vmax.f32 %v1297, -5.0
  %v1330 = vmax.f32 %v1298, -5.0
  %v1331 = vmax.f32 %v1299, -5.0
  %v1332 = vmax.f32 %v1300, -5.0
  %v1333 = vmin.f32 %v1301, 5.0
  %v1334 = vmin.f32 %v1302, 5.0
  %v1335 = vmin.f32 %v1303, 5.0
  %v1336 = vmin.f32 %v1304, 5.0
  %v1337 = vmin.f32 %v1305, 5.0
  %v1338 = vmin.f32 %v1306, 5.0
  %v1339 = vmin.f32 %v1307, 5.0
  %v1340 = vmin.f32 %v1308, 5.0
  %v1341 = vmin.f32 %v1309, 5.0
  %v1342 = vmin.f32 %v1310, 5.0
  %v1343 = vmin.f32 %v1311, 5.0
  %v1344 = vmin.f32 %v1312, 5.0
  %v1345 = vmin.f32 %v1313, 5.0
  %v1346 = vmin.f32 %v1314, 5.0
  %v1347 = vmin.f32 %v1315, 5.0
  %v1348 = vmin.f32 %v1316, 5.0
  %v1349 = vmin.f32 %v1317, 5.0
  %v1350 = vmin.f32 %v1318, 5.0
  %v1351 = vmin.f32 %v1319, 5.0
  %v1352 = vmin.f32 %v1320, 5.0
  %v1353 = vmin.f32 %v1321, 5.0
  %v1354 = vmin.f32 %v1322, 5.0
  %v1355 = vmin.f32 %v1323, 5.0
  %v1356 = vmin.f32 %v1324, 5.0
  %v1357 = vmin.f32 %v1325, 5.0
  %v1358 = vmin.f32 %v1326, 5.0
  %v1359 = vmin.f32 %v1327, 5.0
  %v1360 = vmin.f32 %v1328, 5.0
  %v1361 = vmin.f32 %v1329, 5.0
  %v1362 = vmin.f32 %v1330, 5.0
  %v1363 = vmin.f32 %v1331, 5.0
  %v1364 = vmin.f32 %v1332, 5.0
  %v1365 = vsub.f32 1.0, %v66
  %v1367 = vlaneseq
  %v1368 = vshrl.u32 %v1367, 7
  %v1369 = vsub.s32 0, %v1368
  %v1370 = vrot.slane %v66, %v1369
  %v1372 = vmul.f32 %v34, %v1370
  %v1373 = vmul.f32 %v35, %v1370
  %v1374 = vmul.f32 %v36, %v1370
  %v1375 = vmul.f32 %v37, %v1370
  %v1376 = vmul.f32 %v38, %v1370
  %v1377 = vmul.f32 %v39, %v1370
  %v1378 = vmul.f32 %v40, %v1370
  %v1379 = vmul.f32 %v41, %v1370
  %v1380 = vmul.f32 %v42, %v1370
  %v1381 = vmul.f32 %v43, %v1370
  %v1382 = vmul.f32 %v44, %v1370
  %v1383 = vmul.f32 %v45, %v1370
  %v1384 = vmul.f32 %v46, %v1370
  %v1385 = vmul.f32 %v47, %v1370
  %v1386 = vmul.f32 %v48, %v1370
  %v1387 = vmul.f32 %v49, %v1370
  %v1388 = vmul.f32 %v50, %v1370
  %v1389 = vmul.f32 %v51, %v1370
  %v1390 = vmul.f32 %v52, %v1370
  %v1391 = vmul.f32 %v53, %v1370
  %v1392 = vmul.f32 %v54, %v1370
  %v1393 = vmul.f32 %v55, %v1370
  %v1394 = vmul.f32 %v56, %v1370
  %v1395 = vmul.f32 %v57, %v1370
  %v1396 = vmul.f32 %v58, %v1370
  %v1397 = vmul.f32 %v59, %v1370
  %v1398 = vmul.f32 %v60, %v1370
  %v1399 = vmul.f32 %v61, %v1370
  %v1400 = vmul.f32 %v62, %v1370
  %v1401 = vmul.f32 %v63, %v1370
  %v1402 = vmul.f32 %v64, %v1370
  %v1403 = vmul.f32 %v65, %v1370
  %v1404 = vmul.f32 %v1333, 1.442695
  %v1405 = vpow.pop %v1404
  %v1406 = vmul.f32 %v1334, 1.442695
  %v1407 = vpow.pop %v1406
  %v1408 = vmul.f32 %v1335, 1.442695
  %v1409 = vpow.pop %v1408
  %v1410 = vmul.f32 %v1336, 1.442695
  %v1411 = vpow.pop %v1410
  %v1412 = vmul.f32 %v1337, 1.442695
  %v1413 = vpow.pop %v1412
  %v1414 = vmul.f32 %v1338, 1.442695
  %v1415 = vpow.pop %v1414
  %v1416 = vmul.f32 %v1339, 1.442695
  %v1417 = vpow.pop %v1416
  %v1418 = vmul.f32 %v1340, 1.442695
  %v1419 = vpow.pop %v1418
  %v1420 = vmul.f32 %v1341, 1.442695
  %v1421 = vpow.pop %v1420
  %v1422 = vmul.f32 %v1342, 1.442695
  %v1423 = vpow.pop %v1422
  %v1424 = vmul.f32 %v1343, 1.442695
  %v1425 = vpow.pop %v1424
  %v1426 = vmul.f32 %v1344, 1.442695
  %v1427 = vpow.pop %v1426
  %v1428 = vmul.f32 %v1345, 1.442695
  %v1429 = vpow.pop %v1428
  %v1430 = vmul.f32 %v1346, 1.442695
  %v1431 = vpow.pop %v1430
  %v1432 = vmul.f32 %v1347, 1.442695
  %v1433 = vpow.pop %v1432
  %v1434 = vmul.f32 %v1348, 1.442695
  %v1435 = vpow.pop %v1434
  %v1436 = vmul.f32 %v1349, 1.442695
  %v1437 = vpow.pop %v1436
  %v1438 = vmul.f32 %v1350, 1.442695
  %v1439 = vpow.pop %v1438
  %v1440 = vmul.f32 %v1351, 1.442695
  %v1441 = vpow.pop %v1440
  %v1442 = vmul.f32 %v1352, 1.442695
  %v1443 = vpow.pop %v1442
  %v1444 = vmul.f32 %v1353, 1.442695
  %v1445 = vpow.pop %v1444
  %v1446 = vmul.f32 %v1354, 1.442695
  %v1447 = vpow.pop %v1446
  %v1448 = vmul.f32 %v1355, 1.442695
  %v1449 = vpow.pop %v1448
  %v1450 = vmul.f32 %v1356, 1.442695
  %v1451 = vpow.pop %v1450
  %v1452 = vmul.f32 %v1357, 1.442695
  %v1453 = vpow.pop %v1452
  %v1454 = vmul.f32 %v1358, 1.442695
  %v1455 = vpow.pop %v1454
  %v1456 = vmul.f32 %v1359, 1.442695
  %v1457 = vpow.pop %v1456
  %v1458 = vmul.f32 %v1360, 1.442695
  %v1459 = vpow.pop %v1458
  %v1460 = vmul.f32 %v1361, 1.442695
  %v1461 = vpow.pop %v1460
  %v1462 = vmul.f32 %v1362, 1.442695
  %v1463 = vpow.pop %v1462
  %v1464 = vmul.f32 %v1363, 1.442695
  %v1465 = vpow.pop %v1464
  %v1466 = vmul.f32 %v1364, 1.442695
  %v1467 = vpow.pop %v1466
  %v1468 = vmul.f32 %v34, %v1405
  %v1469 = vmul.f32 %v35, %v1407
  %v1470 = vmul.f32 %v36, %v1409
  %v1471 = vmul.f32 %v37, %v1411
  %v1472 = vmul.f32 %v38, %v1413
  %v1473 = vmul.f32 %v39, %v1415
  %v1474 = vmul.f32 %v40, %v1417
  %v1475 = vmul.f32 %v41, %v1419
  %v1476 = vmul.f32 %v42, %v1421
  %v1477 = vmul.f32 %v43, %v1423
  %v1478 = vmul.f32 %v44, %v1425
  %v1479 = vmul.f32 %v45, %v1427
  %v1480 = vmul.f32 %v46, %v1429
  %v1481 = vmul.f32 %v47, %v1431
  %v1482 = vmul.f32 %v48, %v1433
  %v1483 = vmul.f32 %v49, %v1435
  %v1484 = vmul.f32 %v50, %v1437
  %v1485 = vmul.f32 %v51, %v1439
  %v1486 = vmul.f32 %v52, %v1441
  %v1487 = vmul.f32 %v53, %v1443
  %v1488 = vmul.f32 %v54, %v1445
  %v1489 = vmul.f32 %v55, %v1447
  %v1490 = vmul.f32 %v56, %v1449
  %v1491 = vmul.f32 %v57, %v1451
  %v1492 = vmul.f32 %v58, %v1453
  %v1493 = vmul.f32 %v59, %v1455
  %v1494 = vmul.f32 %v60, %v1457
  %v1495 = vmul.f32 %v61, %v1459
  %v1496 = vmul.f32 %v62, %v1461
  %v1497 = vmul.f32 %v63, %v1463
  %v1498 = vmul.f32 %v64, %v1465
  %v1499 = vmul.f32 %v65, %v1467
  %1532 = vrot.lane.b32.xlu0 %v1105, 120
  %v1533 = vpop.permute.xlu0 %1532
  %1534 = vrot.lane.b32.xlu0 %v1110, 120
  %v1535 = vpop.permute.xlu0 %1534
  %1536 = vrot.lane.b32.xlu0 %v1115, 120
  %v1537 = vpop.permute.xlu0 %1536
  %1538 = vrot.lane.b32.xlu0 %v1120, 120
  %v1539 = vpop.permute.xlu0 %1538
  %1540 = vrot.lane.b32.xlu0 %v1125, 120
  %v1541 = vpop.permute.xlu0 %1540
  %1542 = vrot.lane.b32.xlu0 %v1130, 120
  %v1543 = vpop.permute.xlu0 %1542
  %1544 = vrot.lane.b32.xlu0 %v1135, 120
  %v1545 = vpop.permute.xlu0 %1544
  %1546 = vrot.lane.b32.xlu0 %v1140, 120
  %v1547 = vpop.permute.xlu0 %1546
  %1548 = vrot.lane.b32.xlu0 %v1145, 120
  %v1549 = vpop.permute.xlu0 %1548
  %1550 = vrot.lane.b32.xlu0 %v1150, 120
  %v1551 = vpop.permute.xlu0 %1550
  %1552 = vrot.lane.b32.xlu0 %v1155, 120
  %v1553 = vpop.permute.xlu0 %1552
  %1554 = vrot.lane.b32.xlu0 %v1160, 120
  %v1555 = vpop.permute.xlu0 %1554
  %1556 = vrot.lane.b32.xlu0 %v1165, 120
  %v1557 = vpop.permute.xlu0 %1556
  %1558 = vrot.lane.b32.xlu0 %v1170, 120
  %v1559 = vpop.permute.xlu0 %1558
  %1560 = vrot.lane.b32.xlu0 %v1175, 120
  %v1561 = vpop.permute.xlu0 %1560
  %1562 = vrot.lane.b32.xlu0 %v1180, 120
  %v1563 = vpop.permute.xlu0 %1562
  %1564 = vrot.lane.b32.xlu0 %v1185, 120
  %v1565 = vpop.permute.xlu0 %1564
  %1566 = vrot.lane.b32.xlu0 %v1190, 120
  %v1567 = vpop.permute.xlu0 %1566
  %1568 = vrot.lane.b32.xlu0 %v1195, 120
  %v1569 = vpop.permute.xlu0 %1568
  %1570 = vrot.lane.b32.xlu0 %v1200, 120
  %v1571 = vpop.permute.xlu0 %1570
  %1572 = vrot.lane.b32.xlu0 %v1205, 120
  %v1573 = vpop.permute.xlu0 %1572
  %1574 = vrot.lane.b32.xlu0 %v1210, 120
  %v1575 = vpop.permute.xlu0 %1574
  %1576 = vrot.lane.b32.xlu0 %v1215, 120
  %v1577 = vpop.permute.xlu0 %1576
  %1578 = vrot.lane.b32.xlu0 %v1220, 120
  %v1579 = vpop.permute.xlu0 %1578
  %1580 = vrot.lane.b32.xlu0 %v1225, 120
  %v1581 = vpop.permute.xlu0 %1580
  %1582 = vrot.lane.b32.xlu0 %v1230, 120
  %v1583 = vpop.permute.xlu0 %1582
  %1584 = vrot.lane.b32.xlu0 %v1235, 120
  %v1585 = vpop.permute.xlu0 %1584
  %1586 = vrot.lane.b32.xlu0 %v1240, 120
  %v1587 = vpop.permute.xlu0 %1586
  %1588 = vrot.lane.b32.xlu0 %v1245, 120
  %v1589 = vpop.permute.xlu0 %1588
  %1590 = vrot.lane.b32.xlu0 %v1250, 120
  %v1591 = vpop.permute.xlu0 %1590
  %1592 = vrot.lane.b32.xlu0 %v1255, 120
  %v1593 = vpop.permute.xlu0 %1592
  %1594 = vrot.lane.b32.xlu0 %v1260, 120
  %v1595 = vpop.permute.xlu0 %1594
  %v1628 = vadd.f32 %v1468, %v1533
  %v1629 = vadd.f32 %v1469, %v1535
  %v1630 = vadd.f32 %v1470, %v1537
  %v1631 = vadd.f32 %v1471, %v1539
  %v1632 = vadd.f32 %v1472, %v1541
  %v1633 = vadd.f32 %v1473, %v1543
  %v1634 = vadd.f32 %v1474, %v1545
  %v1635 = vadd.f32 %v1475, %v1547
  %v1636 = vadd.f32 %v1476, %v1549
  %v1637 = vadd.f32 %v1477, %v1551
  %v1638 = vadd.f32 %v1478, %v1553
  %v1639 = vadd.f32 %v1479, %v1555
  %v1640 = vadd.f32 %v1480, %v1557
  %v1641 = vadd.f32 %v1481, %v1559
  %v1642 = vadd.f32 %v1482, %v1561
  %v1643 = vadd.f32 %v1483, %v1563
  %v1644 = vadd.f32 %v1484, %v1565
  %v1645 = vadd.f32 %v1485, %v1567
  %v1646 = vadd.f32 %v1486, %v1569
  %v1647 = vadd.f32 %v1487, %v1571
  %v1648 = vadd.f32 %v1488, %v1573
  %v1649 = vadd.f32 %v1489, %v1575
  %v1650 = vadd.f32 %v1490, %v1577
  %v1651 = vadd.f32 %v1491, %v1579
  %v1652 = vadd.f32 %v1492, %v1581
  %v1653 = vadd.f32 %v1493, %v1583
  %v1654 = vadd.f32 %v1494, %v1585
  %v1655 = vadd.f32 %v1495, %v1587
  %v1656 = vadd.f32 %v1496, %v1589
  %v1657 = vadd.f32 %v1497, %v1591
  %v1658 = vadd.f32 %v1498, %v1593
  %v1659 = vadd.f32 %v1499, %v1595
  %v1661 = vlaneseq
  %v1662 = vshrl.u32 %v1661, 7
  %v1663 = vsub.s32 0, %v1662
  %v1664 = vrot.slane %v1365, %v1663
  %v1666 = vmul.f32 %v1664, %v1628
  %v1667 = vmul.f32 %v1664, %v1629
  %v1668 = vmul.f32 %v1664, %v1630
  %v1669 = vmul.f32 %v1664, %v1631
  %v1670 = vmul.f32 %v1664, %v1632
  %v1671 = vmul.f32 %v1664, %v1633
  %v1672 = vmul.f32 %v1664, %v1634
  %v1673 = vmul.f32 %v1664, %v1635
  %v1674 = vmul.f32 %v1664, %v1636
  %v1675 = vmul.f32 %v1664, %v1637
  %v1676 = vmul.f32 %v1664, %v1638
  %v1677 = vmul.f32 %v1664, %v1639
  %v1678 = vmul.f32 %v1664, %v1640
  %v1679 = vmul.f32 %v1664, %v1641
  %v1680 = vmul.f32 %v1664, %v1642
  %v1681 = vmul.f32 %v1664, %v1643
  %v1682 = vmul.f32 %v1664, %v1644
  %v1683 = vmul.f32 %v1664, %v1645
  %v1684 = vmul.f32 %v1664, %v1646
  %v1685 = vmul.f32 %v1664, %v1647
  %v1686 = vmul.f32 %v1664, %v1648
  %v1687 = vmul.f32 %v1664, %v1649
  %v1688 = vmul.f32 %v1664, %v1650
  %v1689 = vmul.f32 %v1664, %v1651
  %v1690 = vmul.f32 %v1664, %v1652
  %v1691 = vmul.f32 %v1664, %v1653
  %v1692 = vmul.f32 %v1664, %v1654
  %v1693 = vmul.f32 %v1664, %v1655
  %v1694 = vmul.f32 %v1664, %v1656
  %v1695 = vmul.f32 %v1664, %v1657
  %v1696 = vmul.f32 %v1664, %v1658
  %v1697 = vmul.f32 %v1664, %v1659
  %v1698 = vadd.f32 %v1372, %v1666
  %v1699 = vadd.f32 %v1373, %v1667
  %v1700 = vadd.f32 %v1374, %v1668
  %v1701 = vadd.f32 %v1375, %v1669
  %v1702 = vadd.f32 %v1376, %v1670
  %v1703 = vadd.f32 %v1377, %v1671
  %v1704 = vadd.f32 %v1378, %v1672
  %v1705 = vadd.f32 %v1379, %v1673
  %v1706 = vadd.f32 %v1380, %v1674
  %v1707 = vadd.f32 %v1381, %v1675
  %v1708 = vadd.f32 %v1382, %v1676
  %v1709 = vadd.f32 %v1383, %v1677
  %v1710 = vadd.f32 %v1384, %v1678
  %v1711 = vadd.f32 %v1385, %v1679
  %v1712 = vadd.f32 %v1386, %v1680
  %v1713 = vadd.f32 %v1387, %v1681
  %v1714 = vadd.f32 %v1388, %v1682
  %v1715 = vadd.f32 %v1389, %v1683
  %v1716 = vadd.f32 %v1390, %v1684
  %v1717 = vadd.f32 %v1391, %v1685
  %v1718 = vadd.f32 %v1392, %v1686
  %v1719 = vadd.f32 %v1393, %v1687
  %v1720 = vadd.f32 %v1394, %v1688
  %v1721 = vadd.f32 %v1395, %v1689
  %v1722 = vadd.f32 %v1396, %v1690
  %v1723 = vadd.f32 %v1397, %v1691
  %v1724 = vadd.f32 %v1398, %v1692
  %v1725 = vadd.f32 %v1399, %v1693
  %v1726 = vadd.f32 %v1400, %v1694
  %v1727 = vadd.f32 %v1401, %v1695
  %v1728 = vadd.f32 %v1402, %v1696
  %v1729 = vadd.f32 %v1403, %v1697
  %1730 = vst.msk [vmem:[%s9] sm:$0xff] %vm76, %v1698
  %1731 = vst.msk [vmem:[%s9 + $0x8] sm:$0xff] %vm76, %v1699
  %1732 = vst.msk [vmem:[%s9 + $0x10] sm:$0xff] %vm76, %v1700
  %1733 = vst.msk [vmem:[%s9 + $0x18] sm:$0xff] %vm76, %v1701
  %1734 = vst.msk [vmem:[%s9 + $0x20] sm:$0xff] %vm76, %v1702
  %1735 = vst.msk [vmem:[%s9 + $0x28] sm:$0xff] %vm76, %v1703
  %1736 = vst.msk [vmem:[%s9 + $0x30] sm:$0xff] %vm76, %v1704
  %1737 = vst.msk [vmem:[%s9 + $0x38] sm:$0xff] %vm76, %v1705
  %1738 = vst.msk [vmem:[%s9 + $0x40] sm:$0xff] %vm76, %v1706
  %1739 = vst.msk [vmem:[%s9 + $0x48] sm:$0xff] %vm76, %v1707
  %1740 = vst.msk [vmem:[%s9 + $0x50] sm:$0xff] %vm76, %v1708
  %1741 = vst.msk [vmem:[%s9 + $0x58] sm:$0xff] %vm76, %v1709
  %1742 = vst.msk [vmem:[%s9 + $0x60] sm:$0xff] %vm76, %v1710
  %1743 = vst.msk [vmem:[%s9 + $0x68] sm:$0xff] %vm76, %v1711
  %1744 = vst.msk [vmem:[%s9 + $0x70] sm:$0xff] %vm76, %v1712
  %1745 = vst.msk [vmem:[%s9 + $0x78] sm:$0xff] %vm76, %v1713
  %1746 = vst.msk [vmem:[%s9 + $0x80] sm:$0xff] %vm76, %v1714
  %1747 = vst.msk [vmem:[%s9 + $0x88] sm:$0xff] %vm76, %v1715
  %1748 = vst.msk [vmem:[%s9 + $0x90] sm:$0xff] %vm76, %v1716
  %1749 = vst.msk [vmem:[%s9 + $0x98] sm:$0xff] %vm76, %v1717
  %1750 = vst.msk [vmem:[%s9 + $0xa0] sm:$0xff] %vm76, %v1718
  %1751 = vst.msk [vmem:[%s9 + $0xa8] sm:$0xff] %vm76, %v1719
  %1752 = vst.msk [vmem:[%s9 + $0xb0] sm:$0xff] %vm76, %v1720
  %1753 = vst.msk [vmem:[%s9 + $0xb8] sm:$0xff] %vm76, %v1721
  %1754 = vst.msk [vmem:[%s9 + $0xc0] sm:$0xff] %vm76, %v1722
  %1755 = vst.msk [vmem:[%s9 + $0xc8] sm:$0xff] %vm76, %v1723
  %1756 = vst.msk [vmem:[%s9 + $0xd0] sm:$0xff] %vm76, %v1724
  %1757 = vst.msk [vmem:[%s9 + $0xd8] sm:$0xff] %vm76, %v1725
  %1758 = vst.msk [vmem:[%s9 + $0xe0] sm:$0xff] %vm76, %v1726
  %1759 = vst.msk [vmem:[%s9 + $0xe8] sm:$0xff] %vm76, %v1727
  %1760 = vst.msk [vmem:[%s9 + $0xf0] sm:$0xff] %vm76, %v1728
  %1761 = vst.msk [vmem:[%s9 + $0xf8] sm:$0xff] %vm76, %v1729
  %v1762 = vmul.f32 %v1664, %v1333
  %v1763 = vmul.f32 %v1664, %v1334
  %v1764 = vmul.f32 %v1664, %v1335
  %v1765 = vmul.f32 %v1664, %v1336
  %v1766 = vmul.f32 %v1664, %v1337
  %v1767 = vmul.f32 %v1664, %v1338
  %v1768 = vmul.f32 %v1664, %v1339
  %v1769 = vmul.f32 %v1664, %v1340
  %v1770 = vmul.f32 %v1664, %v1341
  %v1771 = vmul.f32 %v1664, %v1342
  %v1772 = vmul.f32 %v1664, %v1343
  %v1773 = vmul.f32 %v1664, %v1344
  %v1774 = vmul.f32 %v1664, %v1345
  %v1775 = vmul.f32 %v1664, %v1346
  %v1776 = vmul.f32 %v1664, %v1347
  %v1777 = vmul.f32 %v1664, %v1348
  %v1778 = vmul.f32 %v1664, %v1349
  %v1779 = vmul.f32 %v1664, %v1350
  %v1780 = vmul.f32 %v1664, %v1351
  %v1781 = vmul.f32 %v1664, %v1352
  %v1782 = vmul.f32 %v1664, %v1353
  %v1783 = vmul.f32 %v1664, %v1354
  %v1784 = vmul.f32 %v1664, %v1355
  %v1785 = vmul.f32 %v1664, %v1356
  %v1786 = vmul.f32 %v1664, %v1357
  %v1787 = vmul.f32 %v1664, %v1358
  %v1788 = vmul.f32 %v1664, %v1359
  %v1789 = vmul.f32 %v1664, %v1360
  %v1790 = vmul.f32 %v1664, %v1361
  %v1791 = vmul.f32 %v1664, %v1362
  %v1792 = vmul.f32 %v1664, %v1363
  %v1793 = vmul.f32 %v1664, %v1364
  %v1794 = vsel %vm76, %v1762, 0.0
  %1795 = vadd.xlane.f32.xlu0 %v1794
  %v1796 = vpop.xlane.xlu0 %1795
  %v1797 = vsel %vm76, %v1763, 0.0
  %1798 = vadd.xlane.f32.xlu0 %v1797
  %v1799 = vpop.xlane.xlu0 %1798
  %v1800 = vsel %vm76, %v1764, 0.0
  %1801 = vadd.xlane.f32.xlu0 %v1800
  %v1802 = vpop.xlane.xlu0 %1801
  %v1803 = vsel %vm76, %v1765, 0.0
  %1804 = vadd.xlane.f32.xlu0 %v1803
  %v1805 = vpop.xlane.xlu0 %1804
  %v1806 = vsel %vm76, %v1766, 0.0
  %1807 = vadd.xlane.f32.xlu0 %v1806
  %v1808 = vpop.xlane.xlu0 %1807
  %v1809 = vsel %vm76, %v1767, 0.0
  %1810 = vadd.xlane.f32.xlu0 %v1809
  %v1811 = vpop.xlane.xlu0 %1810
  %v1812 = vsel %vm76, %v1768, 0.0
  %1813 = vadd.xlane.f32.xlu0 %v1812
  %v1814 = vpop.xlane.xlu0 %1813
  %v1815 = vsel %vm76, %v1769, 0.0
  %1816 = vadd.xlane.f32.xlu0 %v1815
  %v1817 = vpop.xlane.xlu0 %1816
  %v1818 = vsel %vm76, %v1770, 0.0
  %1819 = vadd.xlane.f32.xlu0 %v1818
  %v1820 = vpop.xlane.xlu0 %1819
  %v1821 = vsel %vm76, %v1771, 0.0
  %1822 = vadd.xlane.f32.xlu0 %v1821
  %v1823 = vpop.xlane.xlu0 %1822
  %v1824 = vsel %vm76, %v1772, 0.0
  %1825 = vadd.xlane.f32.xlu0 %v1824
  %v1826 = vpop.xlane.xlu0 %1825
  %v1827 = vsel %vm76, %v1773, 0.0
  %1828 = vadd.xlane.f32.xlu0 %v1827
  %v1829 = vpop.xlane.xlu0 %1828
  %v1830 = vsel %vm76, %v1774, 0.0
  %1831 = vadd.xlane.f32.xlu0 %v1830
  %v1832 = vpop.xlane.xlu0 %1831
  %v1833 = vsel %vm76, %v1775, 0.0
  %1834 = vadd.xlane.f32.xlu0 %v1833
  %v1835 = vpop.xlane.xlu0 %1834
  %v1836 = vsel %vm76, %v1776, 0.0
  %1837 = vadd.xlane.f32.xlu0 %v1836
  %v1838 = vpop.xlane.xlu0 %1837
  %v1839 = vsel %vm76, %v1777, 0.0
  %1840 = vadd.xlane.f32.xlu0 %v1839
  %v1841 = vpop.xlane.xlu0 %1840
  %v1842 = vsel %vm76, %v1778, 0.0
  %1843 = vadd.xlane.f32.xlu0 %v1842
  %v1844 = vpop.xlane.xlu0 %1843
  %v1845 = vsel %vm76, %v1779, 0.0
  %1846 = vadd.xlane.f32.xlu0 %v1845
  %v1847 = vpop.xlane.xlu0 %1846
  %v1848 = vsel %vm76, %v1780, 0.0
  %1849 = vadd.xlane.f32.xlu0 %v1848
  %v1850 = vpop.xlane.xlu0 %1849
  %v1851 = vsel %vm76, %v1781, 0.0
  %1852 = vadd.xlane.f32.xlu0 %v1851
  %v1853 = vpop.xlane.xlu0 %1852
  %v1854 = vsel %vm76, %v1782, 0.0
  %1855 = vadd.xlane.f32.xlu0 %v1854
  %v1856 = vpop.xlane.xlu0 %1855
  %v1857 = vsel %vm76, %v1783, 0.0
  %1858 = vadd.xlane.f32.xlu0 %v1857
  %v1859 = vpop.xlane.xlu0 %1858
  %v1860 = vsel %vm76, %v1784, 0.0
  %1861 = vadd.xlane.f32.xlu0 %v1860
  %v1862 = vpop.xlane.xlu0 %1861
  %v1863 = vsel %vm76, %v1785, 0.0
  %1864 = vadd.xlane.f32.xlu0 %v1863
  %v1865 = vpop.xlane.xlu0 %1864
  %v1866 = vsel %vm76, %v1786, 0.0
  %1867 = vadd.xlane.f32.xlu0 %v1866
  %v1868 = vpop.xlane.xlu0 %1867
  %v1869 = vsel %vm76, %v1787, 0.0
  %1870 = vadd.xlane.f32.xlu0 %v1869
  %v1871 = vpop.xlane.xlu0 %1870
  %v1872 = vsel %vm76, %v1788, 0.0
  %1873 = vadd.xlane.f32.xlu0 %v1872
  %v1874 = vpop.xlane.xlu0 %1873
  %v1875 = vsel %vm76, %v1789, 0.0
  %1876 = vadd.xlane.f32.xlu0 %v1875
  %v1877 = vpop.xlane.xlu0 %1876
  %v1878 = vsel %vm76, %v1790, 0.0
  %1879 = vadd.xlane.f32.xlu0 %v1878
  %v1880 = vpop.xlane.xlu0 %1879
  %v1881 = vsel %vm76, %v1791, 0.0
  %1882 = vadd.xlane.f32.xlu0 %v1881
  %v1883 = vpop.xlane.xlu0 %1882
  %v1884 = vsel %vm76, %v1792, 0.0
  %1885 = vadd.xlane.f32.xlu0 %v1884
  %v1886 = vpop.xlane.xlu0 %1885
  %v1887 = vsel %vm76, %v1793, 0.0
  %1888 = vadd.xlane.f32.xlu0 %v1887
  %v1889 = vpop.xlane.xlu0 %1888
  %vm1890 = vcmask 7168
  %1891 = vst.msk [vmem:[%s10] sm:$0xff] %vm1890, %v1796
  %1892 = vst.msk [vmem:[%s10 + $0x8] sm:$0xff] %vm1890, %v1799
  %1893 = vst.msk [vmem:[%s10 + $0x10] sm:$0xff] %vm1890, %v1802
  %1894 = vst.msk [vmem:[%s10 + $0x18] sm:$0xff] %vm1890, %v1805
  %1895 = vst.msk [vmem:[%s10 + $0x20] sm:$0xff] %vm1890, %v1808
  %1896 = vst.msk [vmem:[%s10 + $0x28] sm:$0xff] %vm1890, %v1811
  %1897 = vst.msk [vmem:[%s10 + $0x30] sm:$0xff] %vm1890, %v1814
  %1898 = vst.msk [vmem:[%s10 + $0x38] sm:$0xff] %vm1890, %v1817
  %1899 = vst.msk [vmem:[%s10 + $0x40] sm:$0xff] %vm1890, %v1820
  %1900 = vst.msk [vmem:[%s10 + $0x48] sm:$0xff] %vm1890, %v1823
  %1901 = vst.msk [vmem:[%s10 + $0x50] sm:$0xff] %vm1890, %v1826
  %1902 = vst.msk [vmem:[%s10 + $0x58] sm:$0xff] %vm1890, %v1829
  %1903 = vst.msk [vmem:[%s10 + $0x60] sm:$0xff] %vm1890, %v1832
  %1904 = vst.msk [vmem:[%s10 + $0x68] sm:$0xff] %vm1890, %v1835
  %1905 = vst.msk [vmem:[%s10 + $0x70] sm:$0xff] %vm1890, %v1838
  %1906 = vst.msk [vmem:[%s10 + $0x78] sm:$0xff] %vm1890, %v1841
  %1907 = vst.msk [vmem:[%s10 + $0x80] sm:$0xff] %vm1890, %v1844
  %1908 = vst.msk [vmem:[%s10 + $0x88] sm:$0xff] %vm1890, %v1847
  %1909 = vst.msk [vmem:[%s10 + $0x90] sm:$0xff] %vm1890, %v1850
  %1910 = vst.msk [vmem:[%s10 + $0x98] sm:$0xff] %vm1890, %v1853
  %1911 = vst.msk [vmem:[%s10 + $0xa0] sm:$0xff] %vm1890, %v1856
  %1912 = vst.msk [vmem:[%s10 + $0xa8] sm:$0xff] %vm1890, %v1859
  %1913 = vst.msk [vmem:[%s10 + $0xb0] sm:$0xff] %vm1890, %v1862
  %1914 = vst.msk [vmem:[%s10 + $0xb8] sm:$0xff] %vm1890, %v1865
  %1915 = vst.msk [vmem:[%s10 + $0xc0] sm:$0xff] %vm1890, %v1868
  %1916 = vst.msk [vmem:[%s10 + $0xc8] sm:$0xff] %vm1890, %v1871
  %1917 = vst.msk [vmem:[%s10 + $0xd0] sm:$0xff] %vm1890, %v1874
  %1918 = vst.msk [vmem:[%s10 + $0xd8] sm:$0xff] %vm1890, %v1877
  %1919 = vst.msk [vmem:[%s10 + $0xe0] sm:$0xff] %vm1890, %v1880
  %1920 = vst.msk [vmem:[%s10 + $0xe8] sm:$0xff] %vm1890, %v1883
  %1921 = vst.msk [vmem:[%s10 + $0xf0] sm:$0xff] %vm1890, %v1886
  %1922 = vst.msk [vmem:[%s10 + $0xf8] sm:$0xff] %vm1890, %v1889
  // Predicated region
  $region38: #{realnvp_forward.1} parent=0 // pred_check
    _
  $region39: #{realnvp_forward.1} parent=0 // pred_check_branch
    %1924 = sbr.rel (0) target = $region41
  $region40: #{realnvp_forward.1} parent=0 // pred_region
    _
  $region41: #{realnvp_forward.1} parent=0 // pred_fallthru
    _
  // Predicated region
  $region42: #{realnvp_forward.1} parent=0 // pred_check
    _
  $region43: #{realnvp_forward.1} parent=0 // pred_check_branch
    %1926 = sbr.rel (0) target = $region45
  $region44: #{realnvp_forward.1} parent=0 // pred_region
    _
  $region45: #{realnvp_forward.1} parent=0 // pred_fallthru
    _
  // Predicated region
  $region46: #{realnvp_forward.1} parent=0 // pred_check
    _
  $region47: #{realnvp_forward.1} parent=0 // pred_check_branch
    %1928 = sbr.rel (0) target = $region49
  $region48: #{realnvp_forward.1} parent=0 // pred_region
    _
  $region49: #{realnvp_forward.1} parent=0 // pred_fallthru
    _
  // Predicated region
  $region50: #{realnvp_forward.1} parent=0 // pred_check
    _
  $region51: #{realnvp_forward.1} parent=0 // pred_check_branch
    %1930 = sbr.rel (0) target = $region53
  $region52: #{realnvp_forward.1} parent=0 // pred_region
    _
  $region53: #{realnvp_forward.1} parent=0 // pred_fallthru
    _

</llo_original>
